<compile_context>
chip_gen: v6e
topology: v6e:2x2x1
jax: 0.10.0
libtpu: 0.0.40
codegen_flags: <defaults>
</compile_context>

<pallas_src>
import functools

import jax
import jax.numpy as jnp
import numpy as np
from jax.experimental import pallas as pl
from jax.experimental.pallas import tpu as pltpu

_LANE = 128

# tap (kh, kw), tap index t = kh*3 + kw  ->  (phase plane, row shift, col shift)
# phases: 0=even/even, 1=even/odd, 2=odd/even, 3=odd/odd rows/cols of x_pad.
_TAPS = (
    (0, 0, 0),  # (0, 0)
    (1, 0, 0),  # (0, 1)
    (0, 0, 1),  # (0, 2)
    (2, 0, 0),  # (1, 0)
    (3, 0, 0),  # (1, 1)
    (2, 0, 1),  # (1, 2)
    (0, 1, 0),  # (2, 0)
    (1, 1, 0),  # (2, 1)
    (0, 1, 1),  # (2, 2)
)


def _is_v5e():
    try:
        kind = jax.devices()[0].device_kind.lower()
    except Exception:
        return False
    return ("v5 lite" in kind) or ("v5e" in kind) or ("v5litepod" in kind)


def _pick_vmem_limit(need_bytes):
    """Footprint-derived, generation-aware scoped-VMEM limit."""
    try:
        phys = int(pltpu.get_tpu_info().vmem_capacity_bytes)
    except Exception:
        phys = 64 * 1024 * 1024  # conservative: v7x per-core physical VMEM
    cap = (phys * 3) // 4        # ~48 MiB on v7x, ~96 MiB on v5e/v6e
    return max(32 * 1024 * 1024, min(2 * int(need_bytes), cap))


def _down_conv_kernel(pee_ref, peo_ref, poe_ref, poo_ref, w_ref, b_ref,
                      o_ref, xcat_ref, *, fuse_k):
    """Fused 3x3 / stride-2 conv for one image x one Cout tile.

    pee/peo/poe/poo: (1, Ho+1, Wo+1, C)  polyphase planes of the padded input
    w_ref:           (9*C, tn) if fuse_k else (9, C, tn)
    b_ref:           (1, tn) float32
    o_ref:           (1, Ho, Wo, tn)
    xcat_ref:        VMEM scratch, (Ho*Wo, 9*C) if fuse_k else (9, Ho*Wo, C)
    """
    _, Ho, Wo, tn = o_ref.shape
    C = pee_ref.shape[3]
    M = Ho * Wo
    planes = (pee_ref, peo_ref, poe_ref, poo_ref)

    # Stage the im2col relayout ONCE per image and reuse it for every Cout tile
    # (the Cout grid axis is "arbitrary"/sequential, so j==0 runs first on the
    # core that will also run j>0 for this image).
    @pl.when(pl.program_id(1) == 0)
    def _stage():
        for t, (p, dh, dw) in enumerate(_TAPS):
            x_t = planes[p][0, dh:dh + Ho, dw:dw + Wo, :].reshape(M, C)
            if fuse_k:
                # C % 128 == 0: lane-aligned, full-width store into the slab.
                xcat_ref[:, t * C:(t + 1) * C] = x_t
            else:
                xcat_ref[t] = x_t

    if fuse_k:
        # Single MXU contraction over K = 9*C: accumulation stays in the MXU,
        # no per-tap VALU add passes over the (M, tn) live value.
        acc = jnp.dot(xcat_ref[...], w_ref[...],
                      preferred_element_type=jnp.float32)
        acc = acc + b_ref[...]
    else:
        # Small / non-lane-aligned C fallback: 9 per-tap dots read from the
        # staged slab (no re-slice per Cout tile); bias seeds the accumulator.
        acc = jnp.broadcast_to(b_ref[...], (M, tn))
        for t in range(9):
            acc = acc + jnp.dot(xcat_ref[t], w_ref[t],
                                preferred_element_type=jnp.float32)

    o_ref[...] = acc.reshape(1, Ho, Wo, tn).astype(o_ref.dtype)


def downsample_conv2d_nhwc(x_nhwc, weight, bias, *, padding=1,
                           compute_dtype=None, out_dtype=None):
    """nn.Conv2d(C, Cout, 3, stride=2, padding=1) semantics, NHWC in / NHWC out.

    compute_dtype=jnp.bfloat16 halves activation/weight HBM traffic (f32
    accumulator and f32 bias are kept); default keeps the input dtype.
    """
    N, H, W, C = x_nhwc.shape
    Cout, Cin, KH, KW = weight.shape
    assert Cin == C and (KH, KW) == (3, 3)
    assert padding == 1, "validated for padding=1 (Downsample default)"
    stride = 2
    Ho = (H + 2 * padding - KH) // stride + 1
    Wo = (W + 2 * padding - KW) // stride + 1
    M = Ho * Wo

    if compute_dtype is None:
        compute_dtype = x_nhwc.dtype
    if out_dtype is None:
        out_dtype = x_nhwc.dtype

    # --- polyphase planes of the zero-padded input (fused im2col: total bytes
    # == padded input, not 9x).  pad + the four stride-2 slices are fused by
    # XLA into a single copy pass over the input.
    Hp, Wp = 2 * (Ho + 1), 2 * (Wo + 1)
    x_pad = jnp.pad(
        x_nhwc.astype(compute_dtype),
        ((0, 0), (padding, Hp - H - padding), (padding, Wp - W - padding), (0, 0)),
    )
    pee = x_pad[:, 0::2, 0::2, :]
    peo = x_pad[:, 0::2, 1::2, :]
    poe = x_pad[:, 1::2, 0::2, :]
    poo = x_pad[:, 1::2, 1::2, :]

    # --- weights OIHW -> (tap, Cin, Cout), Cout padded lane-dense; f32 bias row.
    Cout_pad = -(-Cout // _LANE) * _LANE
    w9 = jnp.transpose(weight, (2, 3, 1, 0)).reshape(KH * KW, C, Cout)
    w9 = jnp.pad(w9, ((0, 0), (0, 0), (0, Cout_pad - Cout))).astype(compute_dtype)
    b_row = jnp.pad(bias, (0, Cout_pad - Cout)).reshape(1, Cout_pad).astype(jnp.float32)

    # Cout tile: 256 feeds the 256-wide MXU on v6e/v7x; v5e's MXU is 128 wide,
    # so a 256 tile only inflates VMEM there.
    tn = 256 if (Cout_pad % 256 == 0 and not _is_v5e()) else _LANE
    n_ct = Cout_pad // tn

    # Fused-K path (single K=9C contraction) when the per-tap channel block is
    # lane aligned; otherwise per-tap dots from the staged slab.
    fuse_k = (C % _LANE == 0)
    if fuse_k:
        w_arg = w9.reshape(KH * KW * C, Cout_pad)
        w_spec = pl.BlockSpec((KH * KW * C, tn), lambda n, j: (0, j))
        xcat_shape = (M, KH * KW * C)
    else:
        w_arg = w9
        w_spec = pl.BlockSpec((KH * KW, C, tn), lambda n, j: (0, 0, j))
        xcat_shape = (KH * KW, M, C)

    # --- footprint-derived VMEM limit (double-buffered pipeline tiles + scratch)
    isz = jnp.dtype(compute_dtype).itemsize
    osz = jnp.dtype(out_dtype).itemsize
    plane_bytes = (Ho + 1) * (Wo + 1) * C * isz
    vmem_need = (
        4 * 2 * plane_bytes            # 4 phase planes, double buffered
        + 2 * 9 * C * tn * isz         # weight tile, double buffered
        + 2 * tn * 4                   # bias row
        + 2 * M * tn * osz             # output tile, double buffered
        + M * 9 * C * isz              # staged im2col slab (scratch)
        + M * tn * 4                   # f32 accumulator live value
    )
    vmem_limit = _pick_vmem_limit(vmem_need)

    cost = pl.CostEstimate(
        flops=2 * N * M * (KH * KW * C) * Cout,
        transcendentals=0,
        bytes_accessed=(4 * N * plane_bytes
                        + N * KH * KW * C * Cout_pad * isz
                        + N * M * Cout_pad * osz),
    )

    phase_spec = pl.BlockSpec((1, Ho + 1, Wo + 1, C), lambda n, j: (n, 0, 0, 0))

    kernel = functools.partial(_down_conv_kernel, fuse_k=fuse_k)
    out = pl.pallas_call(
        kernel,
        out_shape=jax.ShapeDtypeStruct((N, Ho, Wo, Cout_pad), out_dtype),
        grid_spec=pltpu.PrefetchScalarGridSpec(
            num_scalar_prefetch=0,
            grid=(N, n_ct),
            in_specs=[
                phase_spec, phase_spec, phase_spec, phase_spec,
                w_spec,
                pl.BlockSpec((1, tn), lambda n, j: (0, j)),
            ],
            out_specs=pl.BlockSpec((1, Ho, Wo, tn), lambda n, j: (n, 0, 0, j)),
            scratch_shapes=[pltpu.VMEM(xcat_shape, compute_dtype)],
        ),
        compiler_params=pltpu.CompilerParams(
            # Batch axis parallel (megacore shards disjoint plane traffic);
            # Cout axis arbitrary so the slab staged at j==0 is reused for j>0.
            dimension_semantics=("parallel", "arbitrary"),
            vmem_limit_bytes=vmem_limit,
        ),
        cost_estimate=cost,
    )(pee, peo, poe, poo, w_arg, b_row)

    return out[..., :Cout]


def downsample_conv2d(x, weight, bias, padding=1, **kwargs):
    """PyTorch-layout wrapper (NCHW in / NCHW out) == Downsample.forward.

    If the surrounding model keeps activations NHWC, call
    downsample_conv2d_nhwc directly and skip both transposes (each is a full
    HBM pass over the activations).
    """
    x_nhwc = jnp.transpose(x, (0, 2, 3, 1))
    out = downsample_conv2d_nhwc(x_nhwc, weight, bias, padding=padding, **kwargs)
    return jnp.transpose(out, (0, 3, 1, 2))


if __name__ == "__main__":
    key = jax.random.PRNGKey(0)
    kx, kw, kb, kx2, kw2, kb2 = jax.random.split(key, 6)

    # --- Case 1: module-shaped test, NCHW wrapper, f32 (tight tolerance).
    #     Downsample(channels=4, use_conv=True, dims=2, out_channels=4, padding=1)
    N, C, H, W = 2, 4, 16, 16
    Cout = 4
    x = jax.random.normal(kx, (N, C, H, W), dtype=jnp.float32)
    weight = jax.random.normal(kw, (Cout, C, 3, 3), dtype=jnp.float32) * 0.1
    bias = jax.random.normal(kb, (Cout,), dtype=jnp.float32) * 0.1

    y = jax.block_until_ready(jax.jit(downsample_conv2d)(x, weight, bias))
    ref = jax.lax.conv_general_dilated(
        x, weight, window_strides=(2, 2), padding=((1, 1), (1, 1)),
        dimension_numbers=("NCHW", "OIHW", "NCHW"),
    ) + bias.reshape(1, -1, 1, 1)
    ref = jax.block_until_ready(ref)
    assert y.shape == (N, Cout, H // 2, W // 2), y.shape
    assert np.allclose(np.asarray(y), np.asarray(ref), atol=1e-4, rtol=1e-4)

    # --- Case 2: lane-aligned channels -> fused-K MXU path, NHWC end-to-end
    #     (no transposes), bf16 compute with f32 accumulation.
    N2, C2, H2, W2, Cout2 = 1, 128, 8, 8, 128
    x2 = jax.random.normal(kx2, (N2, H2, W2, C2), dtype=jnp.float32)
    w2 = jax.random.normal(kw2, (Cout2, C2, 3, 3), dtype=jnp.float32) * 0.05
    b2 = jax.random.normal(kb2, (Cout2,), dtype=jnp.float32) * 0.05

    fn2 = jax.jit(functools.partial(downsample_conv2d_nhwc,
                                    compute_dtype=jnp.bfloat16))
    y2 = jax.block_until_ready(fn2(x2, w2, b2))
    ref2 = jax.lax.conv_general_dilated(
        x2.astype(jnp.bfloat16), w2.astype(jnp.bfloat16),
        window_strides=(2, 2), padding=((1, 1), (1, 1)),
        dimension_numbers=("NHWC", "OIHW", "NHWC"),
        preferred_element_type=jnp.float32,
    ) + b2.reshape(1, 1, 1, -1)
    ref2 = jax.block_until_ready(ref2)
    assert y2.shape == (N2, H2 // 2, W2 // 2, Cout2), y2.shape
    assert np.allclose(np.asarray(y2, np.float32), np.asarray(ref2, np.float32),
                       atol=3e-2, rtol=3e-2)

    print("KERNEL_OK")
</pallas_src>

<mosaic_0001>
module attributes {stable_mosaic.version = 11 : i64} {
  func.func @_down_conv_kernel(%arg0: i32, %arg1: i32, %arg2: memref<1x9x9x4xf32, #tpu.memory_space<vmem>>, %arg3: memref<1x9x9x4xf32, #tpu.memory_space<vmem>>, %arg4: memref<1x9x9x4xf32, #tpu.memory_space<vmem>>, %arg5: memref<1x9x9x4xf32, #tpu.memory_space<vmem>>, %arg6: memref<9x4x128xf32, #tpu.memory_space<vmem>>, %arg7: memref<1x128xf32, #tpu.memory_space<vmem>>, %arg8: memref<1x8x8x128xf32, #tpu.memory_space<vmem>>, %arg9: memref<9x64x4xf32, #tpu.memory_space<vmem>>) attributes {dimension_semantics = [#tpu.dimension_semantics<parallel>, #tpu.dimension_semantics<arbitrary>], iteration_bounds = array<i64: 2, 1>, scalar_prefetch = 0 : i64, scratch_operands = 1 : i64, tpu.core_type = #tpu.core_type<tc>, window_params = [{transform_indices = @transform_0, window_bounds = array<i64: 1, 9, 9, 4>}, {transform_indices = @transform_1, window_bounds = array<i64: 1, 9, 9, 4>}, {transform_indices = @transform_2, window_bounds = array<i64: 1, 9, 9, 4>}, {transform_indices = @transform_3, window_bounds = array<i64: 1, 9, 9, 4>}, {transform_indices = @transform_4, window_bounds = array<i64: 9, 4, 128>}, {transform_indices = @transform_5, window_bounds = array<i64: 1, 128>}, {transform_indices = @transform_6, window_bounds = array<i64: 1, 8, 8, 128>}]} {
    %c0_i32 = arith.constant 0 : i32
    %0 = arith.cmpi eq, %arg1, %c0_i32 : i32
    %1 = arith.extui %0 : i1 to i32
    %c0_i32_0 = arith.constant 0 : i32
    %2 = arith.cmpi ne, %1, %c0_i32_0 : i32
    scf.if %2 {
      %c0_60 = arith.constant 0 : index
      %c0_61 = arith.constant 0 : index
      %c0_62 = arith.constant 0 : index
      %c0_63 = arith.constant 0 : index
      %62 = vector.load %arg2[%c0_60, %c0_61, %c0_62, %c0_63] : memref<1x9x9x4xf32, #tpu.memory_space<vmem>>, vector<1x8x8x4xf32>
      %63 = vector.shape_cast %62 : vector<1x8x8x4xf32> to vector<8x8x4xf32>
      %64 = vector.shape_cast %63 : vector<8x8x4xf32> to vector<64x4xf32>
      %c0_64 = arith.constant 0 : index
      %c0_65 = arith.constant 0 : index
      %c0_66 = arith.constant 0 : index
      %65 = vector.load %arg9[%c0_64, %c0_65, %c0_66] : memref<9x64x4xf32, #tpu.memory_space<vmem>>, vector<1x64x4xf32>
      %66 = vector.shape_cast %65 : vector<1x64x4xf32> to vector<64x4xf32>
      %67 = vector.shape_cast %64 : vector<64x4xf32> to vector<1x64x4xf32>
      tpu.vector_store %arg9[%c0_64, %c0_65, %c0_66], %67 {strides = array<i32>} : memref<9x64x4xf32, #tpu.memory_space<vmem>>, vector<1x64x4xf32>,
      %c0_67 = arith.constant 0 : index
      %c0_68 = arith.constant 0 : index
      %c0_69 = arith.constant 0 : index
      %c0_70 = arith.constant 0 : index
      %68 = vector.load %arg3[%c0_67, %c0_68, %c0_69, %c0_70] : memref<1x9x9x4xf32, #tpu.memory_space<vmem>>, vector<1x8x8x4xf32>
      %69 = vector.shape_cast %68 : vector<1x8x8x4xf32> to vector<8x8x4xf32>
      %70 = vector.shape_cast %69 : vector<8x8x4xf32> to vector<64x4xf32>
      %c1_71 = arith.constant 1 : index
      %c0_72 = arith.constant 0 : index
      %c0_73 = arith.constant 0 : index
      %71 = vector.load %arg9[%c1_71, %c0_72, %c0_73] : memref<9x64x4xf32, #tpu.memory_space<vmem>>, vector<1x64x4xf32>
      %72 = vector.shape_cast %71 : vector<1x64x4xf32> to vector<64x4xf32>
      %73 = vector.shape_cast %70 : vector<64x4xf32> to vector<1x64x4xf32>
      tpu.vector_store %arg9[%c1_71, %c0_72, %c0_73], %73 {strides = array<i32>} : memref<9x64x4xf32, #tpu.memory_space<vmem>>, vector<1x64x4xf32>,
      %c0_74 = arith.constant 0 : index
      %c0_75 = arith.constant 0 : index
      %c1_76 = arith.constant 1 : index
      %c0_77 = arith.constant 0 : index
      %74 = vector.load %arg2[%c0_74, %c0_75, %c1_76, %c0_77] : memref<1x9x9x4xf32, #tpu.memory_space<vmem>>, vector<1x8x8x4xf32>
      %75 = vector.shape_cast %74 : vector<1x8x8x4xf32> to vector<8x8x4xf32>
      %76 = vector.shape_cast %75 : vector<8x8x4xf32> to vector<64x4xf32>
      %c2_78 = arith.constant 2 : index
      %c0_79 = arith.constant 0 : index
      %c0_80 = arith.constant 0 : index
      %77 = vector.load %arg9[%c2_78, %c0_79, %c0_80] : memref<9x64x4xf32, #tpu.memory_space<vmem>>, vector<1x64x4xf32>
      %78 = vector.shape_cast %77 : vector<1x64x4xf32> to vector<64x4xf32>
      %79 = vector.shape_cast %76 : vector<64x4xf32> to vector<1x64x4xf32>
      tpu.vector_store %arg9[%c2_78, %c0_79, %c0_80], %79 {strides = array<i32>} : memref<9x64x4xf32, #tpu.memory_space<vmem>>, vector<1x64x4xf32>,
      %c0_81 = arith.constant 0 : index
      %c0_82 = arith.constant 0 : index
      %c0_83 = arith.constant 0 : index
      %c0_84 = arith.constant 0 : index
      %80 = vector.load %arg4[%c0_81, %c0_82, %c0_83, %c0_84] : memref<1x9x9x4xf32, #tpu.memory_space<vmem>>, vector<1x8x8x4xf32>
      %81 = vector.shape_cast %80 : vector<1x8x8x4xf32> to vector<8x8x4xf32>
      %82 = vector.shape_cast %81 : vector<8x8x4xf32> to vector<64x4xf32>
      %c3_85 = arith.constant 3 : index
      %c0_86 = arith.constant 0 : index
      %c0_87 = arith.constant 0 : index
      %83 = vector.load %arg9[%c3_85, %c0_86, %c0_87] : memref<9x64x4xf32, #tpu.memory_space<vmem>>, vector<1x64x4xf32>
      %84 = vector.shape_cast %83 : vector<1x64x4xf32> to vector<64x4xf32>
      %85 = vector.shape_cast %82 : vector<64x4xf32> to vector<1x64x4xf32>
      tpu.vector_store %arg9[%c3_85, %c0_86, %c0_87], %85 {strides = array<i32>} : memref<9x64x4xf32, #tpu.memory_space<vmem>>, vector<1x64x4xf32>,
      %c0_88 = arith.constant 0 : index
      %c0_89 = arith.constant 0 : index
      %c0_90 = arith.constant 0 : index
      %c0_91 = arith.constant 0 : index
      %86 = vector.load %arg5[%c0_88, %c0_89, %c0_90, %c0_91] : memref<1x9x9x4xf32, #tpu.memory_space<vmem>>, vector<1x8x8x4xf32>
      %87 = vector.shape_cast %86 : vector<1x8x8x4xf32> to vector<8x8x4xf32>
      %88 = vector.shape_cast %87 : vector<8x8x4xf32> to vector<64x4xf32>
      %c4_92 = arith.constant 4 : index
      %c0_93 = arith.constant 0 : index
      %c0_94 = arith.constant 0 : index
      %89 = vector.load %arg9[%c4_92, %c0_93, %c0_94] : memref<9x64x4xf32, #tpu.memory_space<vmem>>, vector<1x64x4xf32>
      %90 = vector.shape_cast %89 : vector<1x64x4xf32> to vector<64x4xf32>
      %91 = vector.shape_cast %88 : vector<64x4xf32> to vector<1x64x4xf32>
      tpu.vector_store %arg9[%c4_92, %c0_93, %c0_94], %91 {strides = array<i32>} : memref<9x64x4xf32, #tpu.memory_space<vmem>>, vector<1x64x4xf32>,
      %c0_95 = arith.constant 0 : index
      %c0_96 = arith.constant 0 : index
      %c1_97 = arith.constant 1 : index
      %c0_98 = arith.constant 0 : index
      %92 = vector.load %arg4[%c0_95, %c0_96, %c1_97, %c0_98] : memref<1x9x9x4xf32, #tpu.memory_space<vmem>>, vector<1x8x8x4xf32>
      %93 = vector.shape_cast %92 : vector<1x8x8x4xf32> to vector<8x8x4xf32>
      %94 = vector.shape_cast %93 : vector<8x8x4xf32> to vector<64x4xf32>
      %c5_99 = arith.constant 5 : index
      %c0_100 = arith.constant 0 : index
      %c0_101 = arith.constant 0 : index
      %95 = vector.load %arg9[%c5_99, %c0_100, %c0_101] : memref<9x64x4xf32, #tpu.memory_space<vmem>>, vector<1x64x4xf32>
      %96 = vector.shape_cast %95 : vector<1x64x4xf32> to vector<64x4xf32>
      %97 = vector.shape_cast %94 : vector<64x4xf32> to vector<1x64x4xf32>
      tpu.vector_store %arg9[%c5_99, %c0_100, %c0_101], %97 {strides = array<i32>} : memref<9x64x4xf32, #tpu.memory_space<vmem>>, vector<1x64x4xf32>,
      %c0_102 = arith.constant 0 : index
      %c1_103 = arith.constant 1 : index
      %c0_104 = arith.constant 0 : index
      %c0_105 = arith.constant 0 : index
      %98 = vector.load %arg2[%c0_102, %c1_103, %c0_104, %c0_105] : memref<1x9x9x4xf32, #tpu.memory_space<vmem>>, vector<1x8x8x4xf32>
      %99 = vector.shape_cast %98 : vector<1x8x8x4xf32> to vector<8x8x4xf32>
      %100 = vector.shape_cast %99 : vector<8x8x4xf32> to vector<64x4xf32>
      %c6_106 = arith.constant 6 : index
      %c0_107 = arith.constant 0 : index
      %c0_108 = arith.constant 0 : index
      %101 = vector.load %arg9[%c6_106, %c0_107, %c0_108] : memref<9x64x4xf32, #tpu.memory_space<vmem>>, vector<1x64x4xf32>
      %102 = vector.shape_cast %101 : vector<1x64x4xf32> to vector<64x4xf32>
      %103 = vector.shape_cast %100 : vector<64x4xf32> to vector<1x64x4xf32>
      tpu.vector_store %arg9[%c6_106, %c0_107, %c0_108], %103 {strides = array<i32>} : memref<9x64x4xf32, #tpu.memory_space<vmem>>, vector<1x64x4xf32>,
      %c0_109 = arith.constant 0 : index
      %c1_110 = arith.constant 1 : index
      %c0_111 = arith.constant 0 : index
      %c0_112 = arith.constant 0 : index
      %104 = vector.load %arg3[%c0_109, %c1_110, %c0_111, %c0_112] : memref<1x9x9x4xf32, #tpu.memory_space<vmem>>, vector<1x8x8x4xf32>
      %105 = vector.shape_cast %104 : vector<1x8x8x4xf32> to vector<8x8x4xf32>
      %106 = vector.shape_cast %105 : vector<8x8x4xf32> to vector<64x4xf32>
      %c7_113 = arith.constant 7 : index
      %c0_114 = arith.constant 0 : index
      %c0_115 = arith.constant 0 : index
      %107 = vector.load %arg9[%c7_113, %c0_114, %c0_115] : memref<9x64x4xf32, #tpu.memory_space<vmem>>, vector<1x64x4xf32>
      %108 = vector.shape_cast %107 : vector<1x64x4xf32> to vector<64x4xf32>
      %109 = vector.shape_cast %106 : vector<64x4xf32> to vector<1x64x4xf32>
      tpu.vector_store %arg9[%c7_113, %c0_114, %c0_115], %109 {strides = array<i32>} : memref<9x64x4xf32, #tpu.memory_space<vmem>>, vector<1x64x4xf32>,
      %c0_116 = arith.constant 0 : index
      %c1_117 = arith.constant 1 : index
      %c1_118 = arith.constant 1 : index
      %c0_119 = arith.constant 0 : index
      %110 = vector.load %arg2[%c0_116, %c1_117, %c1_118, %c0_119] : memref<1x9x9x4xf32, #tpu.memory_space<vmem>>, vector<1x8x8x4xf32>
      %111 = vector.shape_cast %110 : vector<1x8x8x4xf32> to vector<8x8x4xf32>
      %112 = vector.shape_cast %111 : vector<8x8x4xf32> to vector<64x4xf32>
      %c8_120 = arith.constant 8 : index
      %c0_121 = arith.constant 0 : index
      %c0_122 = arith.constant 0 : index
      %113 = vector.load %arg9[%c8_120, %c0_121, %c0_122] : memref<9x64x4xf32, #tpu.memory_space<vmem>>, vector<1x64x4xf32>
      %114 = vector.shape_cast %113 : vector<1x64x4xf32> to vector<64x4xf32>
      %115 = vector.shape_cast %112 : vector<64x4xf32> to vector<1x64x4xf32>
      tpu.vector_store %arg9[%c8_120, %c0_121, %c0_122], %115 {strides = array<i32>} : memref<9x64x4xf32, #tpu.memory_space<vmem>>, vector<1x64x4xf32>,
    } else {
    }
    %c0 = arith.constant 0 : index
    %c0_1 = arith.constant 0 : index
    %3 = vector.load %arg7[%c0, %c0_1] : memref<1x128xf32, #tpu.memory_space<vmem>>, vector<1x128xf32>
    %4 = vector.shape_cast %3 : vector<1x128xf32> to vector<1x128xf32>
    %5 = vector.broadcast %4 : vector<1x128xf32> to vector<64x128xf32>
    %c0_2 = arith.constant 0 : index
    %c0_3 = arith.constant 0 : index
    %c0_4 = arith.constant 0 : index
    %6 = vector.load %arg9[%c0_2, %c0_3, %c0_4] : memref<9x64x4xf32, #tpu.memory_space<vmem>>, vector<1x64x4xf32>
    %7 = vector.shape_cast %6 : vector<1x64x4xf32> to vector<64x4xf32>
    %c0_5 = arith.constant 0 : index
    %c0_6 = arith.constant 0 : index
    %c0_7 = arith.constant 0 : index
    %8 = vector.load %arg6[%c0_5, %c0_6, %c0_7] : memref<9x4x128xf32, #tpu.memory_space<vmem>>, vector<1x4x128xf32>
    %9 = vector.shape_cast %8 : vector<1x4x128xf32> to vector<4x128xf32>
    %cst = arith.constant dense<0.000000e+00> : vector<64x128xf32>
    %10 = tpu.matmul %7, %9, %cst {dimension_numbers = #tpu.dot_dimension_numbers<[1], [0], [0], [1], [0, 0, 1, 1], [], []>} : vector<64x4xf32>, vector<4x128xf32>, vector<64x128xf32> -> vector<64x128xf32>
    %11 = arith.addf %5, %10 : vector<64x128xf32>
    %c1 = arith.constant 1 : index
    %c0_8 = arith.constant 0 : index
    %c0_9 = arith.constant 0 : index
    %12 = vector.load %arg9[%c1, %c0_8, %c0_9] : memref<9x64x4xf32, #tpu.memory_space<vmem>>, vector<1x64x4xf32>
    %13 = vector.shape_cast %12 : vector<1x64x4xf32> to vector<64x4xf32>
    %c1_10 = arith.constant 1 : index
    %c0_11 = arith.constant 0 : index
    %c0_12 = arith.constant 0 : index
    %14 = vector.load %arg6[%c1_10, %c0_11, %c0_12] : memref<9x4x128xf32, #tpu.memory_space<vmem>>, vector<1x4x128xf32>
    %15 = vector.shape_cast %14 : vector<1x4x128xf32> to vector<4x128xf32>
    %cst_13 = arith.constant dense<0.000000e+00> : vector<64x128xf32>
    %16 = tpu.matmul %13, %15, %cst_13 {dimension_numbers = #tpu.dot_dimension_numbers<[1], [0], [0], [1], [0, 0, 1, 1], [], []>} : vector<64x4xf32>, vector<4x128xf32>, vector<64x128xf32> -> vector<64x128xf32>
    %17 = arith.addf %11, %16 : vector<64x128xf32>
    %c2 = arith.constant 2 : index
    %c0_14 = arith.constant 0 : index
    %c0_15 = arith.constant 0 : index
    %18 = vector.load %arg9[%c2, %c0_14, %c0_15] : memref<9x64x4xf32, #tpu.memory_space<vmem>>, vector<1x64x4xf32>
    %19 = vector.shape_cast %18 : vector<1x64x4xf32> to vector<64x4xf32>
    %c2_16 = arith.constant 2 : index
    %c0_17 = arith.constant 0 : index
    %c0_18 = arith.constant 0 : index
    %20 = vector.load %arg6[%c2_16, %c0_17, %c0_18] : memref<9x4x128xf32, #tpu.memory_space<vmem>>, vector<1x4x128xf32>
    %21 = vector.shape_cast %20 : vector<1x4x128xf32> to vector<4x128xf32>
    %cst_19 = arith.constant dense<0.000000e+00> : vector<64x128xf32>
    %22 = tpu.matmul %19, %21, %cst_19 {dimension_numbers = #tpu.dot_dimension_numbers<[1], [0], [0], [1], [0, 0, 1, 1], [], []>} : vector<64x4xf32>, vector<4x128xf32>, vector<64x128xf32> -> vector<64x128xf32>
    %23 = arith.addf %17, %22 : vector<64x128xf32>
    %c3 = arith.constant 3 : index
    %c0_20 = arith.constant 0 : index
    %c0_21 = arith.constant 0 : index
    %24 = vector.load %arg9[%c3, %c0_20, %c0_21] : memref<9x64x4xf32, #tpu.memory_space<vmem>>, vector<1x64x4xf32>
    %25 = vector.shape_cast %24 : vector<1x64x4xf32> to vector<64x4xf32>
    %c3_22 = arith.constant 3 : index
    %c0_23 = arith.constant 0 : index
    %c0_24 = arith.constant 0 : index
    %26 = vector.load %arg6[%c3_22, %c0_23, %c0_24] : memref<9x4x128xf32, #tpu.memory_space<vmem>>, vector<1x4x128xf32>
    %27 = vector.shape_cast %26 : vector<1x4x128xf32> to vector<4x128xf32>
    %cst_25 = arith.constant dense<0.000000e+00> : vector<64x128xf32>
    %28 = tpu.matmul %25, %27, %cst_25 {dimension_numbers = #tpu.dot_dimension_numbers<[1], [0], [0], [1], [0, 0, 1, 1], [], []>} : vector<64x4xf32>, vector<4x128xf32>, vector<64x128xf32> -> vector<64x128xf32>
    %29 = arith.addf %23, %28 : vector<64x128xf32>
    %c4 = arith.constant 4 : index
    %c0_26 = arith.constant 0 : index
    %c0_27 = arith.constant 0 : index
    %30 = vector.load %arg9[%c4, %c0_26, %c0_27] : memref<9x64x4xf32, #tpu.memory_space<vmem>>, vector<1x64x4xf32>
    %31 = vector.shape_cast %30 : vector<1x64x4xf32> to vector<64x4xf32>
    %c4_28 = arith.constant 4 : index
    %c0_29 = arith.constant 0 : index
    %c0_30 = arith.constant 0 : index
    %32 = vector.load %arg6[%c4_28, %c0_29, %c0_30] : memref<9x4x128xf32, #tpu.memory_space<vmem>>, vector<1x4x128xf32>
    %33 = vector.shape_cast %32 : vector<1x4x128xf32> to vector<4x128xf32>
    %cst_31 = arith.constant dense<0.000000e+00> : vector<64x128xf32>
    %34 = tpu.matmul %31, %33, %cst_31 {dimension_numbers = #tpu.dot_dimension_numbers<[1], [0], [0], [1], [0, 0, 1, 1], [], []>} : vector<64x4xf32>, vector<4x128xf32>, vector<64x128xf32> -> vector<64x128xf32>
    %35 = arith.addf %29, %34 : vector<64x128xf32>
    %c5 = arith.constant 5 : index
    %c0_32 = arith.constant 0 : index
    %c0_33 = arith.constant 0 : index
    %36 = vector.load %arg9[%c5, %c0_32, %c0_33] : memref<9x64x4xf32, #tpu.memory_space<vmem>>, vector<1x64x4xf32>
    %37 = vector.shape_cast %36 : vector<1x64x4xf32> to vector<64x4xf32>
    %c5_34 = arith.constant 5 : index
    %c0_35 = arith.constant 0 : index
    %c0_36 = arith.constant 0 : index
    %38 = vector.load %arg6[%c5_34, %c0_35, %c0_36] : memref<9x4x128xf32, #tpu.memory_space<vmem>>, vector<1x4x128xf32>
    %39 = vector.shape_cast %38 : vector<1x4x128xf32> to vector<4x128xf32>
    %cst_37 = arith.constant dense<0.000000e+00> : vector<64x128xf32>
    %40 = tpu.matmul %37, %39, %cst_37 {dimension_numbers = #tpu.dot_dimension_numbers<[1], [0], [0], [1], [0, 0, 1, 1], [], []>} : vector<64x4xf32>, vector<4x128xf32>, vector<64x128xf32> -> vector<64x128xf32>
    %41 = arith.addf %35, %40 : vector<64x128xf32>
    %c6 = arith.constant 6 : index
    %c0_38 = arith.constant 0 : index
    %c0_39 = arith.constant 0 : index
    %42 = vector.load %arg9[%c6, %c0_38, %c0_39] : memref<9x64x4xf32, #tpu.memory_space<vmem>>, vector<1x64x4xf32>
    %43 = vector.shape_cast %42 : vector<1x64x4xf32> to vector<64x4xf32>
    %c6_40 = arith.constant 6 : index
    %c0_41 = arith.constant 0 : index
    %c0_42 = arith.constant 0 : index
    %44 = vector.load %arg6[%c6_40, %c0_41, %c0_42] : memref<9x4x128xf32, #tpu.memory_space<vmem>>, vector<1x4x128xf32>
    %45 = vector.shape_cast %44 : vector<1x4x128xf32> to vector<4x128xf32>
    %cst_43 = arith.constant dense<0.000000e+00> : vector<64x128xf32>
    %46 = tpu.matmul %43, %45, %cst_43 {dimension_numbers = #tpu.dot_dimension_numbers<[1], [0], [0], [1], [0, 0, 1, 1], [], []>} : vector<64x4xf32>, vector<4x128xf32>, vector<64x128xf32> -> vector<64x128xf32>
    %47 = arith.addf %41, %46 : vector<64x128xf32>
    %c7 = arith.constant 7 : index
    %c0_44 = arith.constant 0 : index
    %c0_45 = arith.constant 0 : index
    %48 = vector.load %arg9[%c7, %c0_44, %c0_45] : memref<9x64x4xf32, #tpu.memory_space<vmem>>, vector<1x64x4xf32>
    %49 = vector.shape_cast %48 : vector<1x64x4xf32> to vector<64x4xf32>
    %c7_46 = arith.constant 7 : index
    %c0_47 = arith.constant 0 : index
    %c0_48 = arith.constant 0 : index
    %50 = vector.load %arg6[%c7_46, %c0_47, %c0_48] : memref<9x4x128xf32, #tpu.memory_space<vmem>>, vector<1x4x128xf32>
    %51 = vector.shape_cast %50 : vector<1x4x128xf32> to vector<4x128xf32>
    %cst_49 = arith.constant dense<0.000000e+00> : vector<64x128xf32>
    %52 = tpu.matmul %49, %51, %cst_49 {dimension_numbers = #tpu.dot_dimension_numbers<[1], [0], [0], [1], [0, 0, 1, 1], [], []>} : vector<64x4xf32>, vector<4x128xf32>, vector<64x128xf32> -> vector<64x128xf32>
    %53 = arith.addf %47, %52 : vector<64x128xf32>
    %c8 = arith.constant 8 : index
    %c0_50 = arith.constant 0 : index
    %c0_51 = arith.constant 0 : index
    %54 = vector.load %arg9[%c8, %c0_50, %c0_51] : memref<9x64x4xf32, #tpu.memory_space<vmem>>, vector<1x64x4xf32>
    %55 = vector.shape_cast %54 : vector<1x64x4xf32> to vector<64x4xf32>
    %c8_52 = arith.constant 8 : index
    %c0_53 = arith.constant 0 : index
    %c0_54 = arith.constant 0 : index
    %56 = vector.load %arg6[%c8_52, %c0_53, %c0_54] : memref<9x4x128xf32, #tpu.memory_space<vmem>>, vector<1x4x128xf32>
    %57 = vector.shape_cast %56 : vector<1x4x128xf32> to vector<4x128xf32>
    %cst_55 = arith.constant dense<0.000000e+00> : vector<64x128xf32>
    %58 = tpu.matmul %55, %57, %cst_55 {dimension_numbers = #tpu.dot_dimension_numbers<[1], [0], [0], [1], [0, 0, 1, 1], [], []>} : vector<64x4xf32>, vector<4x128xf32>, vector<64x128xf32> -> vector<64x128xf32>
    %59 = arith.addf %53, %58 : vector<64x128xf32>
    %60 = vector.shape_cast %59 : vector<64x128xf32> to vector<1x8x8x128xf32>
    %c0_56 = arith.constant 0 : index
    %c0_57 = arith.constant 0 : index
    %c0_58 = arith.constant 0 : index
    %c0_59 = arith.constant 0 : index
    %61 = vector.load %arg8[%c0_56, %c0_57, %c0_58, %c0_59] : memref<1x8x8x128xf32, #tpu.memory_space<vmem>>, vector<1x8x8x128xf32>
    tpu.vector_store %arg8[%c0_56, %c0_57, %c0_58, %c0_59], %60 {strides = array<i32>} : memref<1x8x8x128xf32, #tpu.memory_space<vmem>>, vector<1x8x8x128xf32>,
    return
  }
  func.func @transform_0(%arg0: i32, %arg1: i32) -> (i32, i32, i32, i32) {
    %c0_i32 = arith.constant 0 : i32
    %c0_i32_0 = arith.constant 0 : i32
    %c0_i32_1 = arith.constant 0 : i32
    %c0_i32_2 = arith.constant 0 : i32
    return %arg0, %c0_i32, %c0_i32_0, %c0_i32_1 : i32, i32, i32, i32
  }
  func.func @transform_1(%arg0: i32, %arg1: i32) -> (i32, i32, i32, i32) {
    %c0_i32 = arith.constant 0 : i32
    %c0_i32_0 = arith.constant 0 : i32
    %c0_i32_1 = arith.constant 0 : i32
    %c0_i32_2 = arith.constant 0 : i32
    return %arg0, %c0_i32, %c0_i32_0, %c0_i32_1 : i32, i32, i32, i32
  }
  func.func @transform_2(%arg0: i32, %arg1: i32) -> (i32, i32, i32, i32) {
    %c0_i32 = arith.constant 0 : i32
    %c0_i32_0 = arith.constant 0 : i32
    %c0_i32_1 = arith.constant 0 : i32
    %c0_i32_2 = arith.constant 0 : i32
    return %arg0, %c0_i32, %c0_i32_0, %c0_i32_1 : i32, i32, i32, i32
  }
  func.func @transform_3(%arg0: i32, %arg1: i32) -> (i32, i32, i32, i32) {
    %c0_i32 = arith.constant 0 : i32
    %c0_i32_0 = arith.constant 0 : i32
    %c0_i32_1 = arith.constant 0 : i32
    %c0_i32_2 = arith.constant 0 : i32
    return %arg0, %c0_i32, %c0_i32_0, %c0_i32_1 : i32, i32, i32, i32
  }
  func.func @transform_4(%arg0: i32, %arg1: i32) -> (i32, i32, i32) {
    %c0_i32 = arith.constant 0 : i32
    %c0_i32_0 = arith.constant 0 : i32
    %c0_i32_1 = arith.constant 0 : i32
    return %c0_i32, %c0_i32_0, %arg1 : i32, i32, i32
  }
  func.func @transform_5(%arg0: i32, %arg1: i32) -> (i32, i32) {
    %c0_i32 = arith.constant 0 : i32
    %c0_i32_0 = arith.constant 0 : i32
    return %c0_i32, %arg1 : i32, i32
  }
  func.func @transform_6(%arg0: i32, %arg1: i32) -> (i32, i32, i32, i32) {
    %c0_i32 = arith.constant 0 : i32
    %c0_i32_0 = arith.constant 0 : i32
    %c0_i32_1 = arith.constant 0 : i32
    return %arg0, %c0_i32, %c0_i32_0, %arg1 : i32, i32, i32, i32
  }
}

</mosaic_0001>

<llo_original>
// kernel: downsample_conv2d.1
$region0: #{downsample_conv2d.1}
  #allocation0 [shape = 'u32[]', space=smem, size = 0x4, offset = 0x4, fixed_abs, tag = 'smem constant byte address 0x4 - core index']
  #allocation1 [shape = 'u32[144,128]{1,0:T(1,128)}', space=vmem, size = 0x12000, scoped, tag = 'internal scratch']
  #allocation2 [shape = 'f32[9,64,4]{2,1,0:T(8,128)}', space=vmem, size = 0x48000, scoped, tag = 'scratch operand']
  %s0 = inlined_call_operand.vmem [shape: f32[2,9,9,4], index: 0, kind: input, shape index: {}]
  %s1 = inlined_call_operand.vmem [shape: f32[2,9,9,4], index: 1, kind: input, shape index: {}]
  %s2 = inlined_call_operand.vmem [shape: f32[2,9,9,4], index: 2, kind: input, shape index: {}]
  %s3 = inlined_call_operand.vmem [shape: f32[2,9,9,4], index: 3, kind: input, shape index: {}]
  %s4 = inlined_call_operand.vmem [shape: f32[9,4,128], index: 4, kind: input, shape index: {}]
  %s5 = inlined_call_operand.vmem [shape: f32[1,128], index: 5, kind: input, shape index: {}]
  %s6 = inlined_call_operand.vmem [shape: f32[2,8,8,128], index: 6, kind: output, shape index: {}]
  %s7 = sld [smem:[#allocation0]]
  $region61: #{downsample_conv2d.1} parent=0
    _
  %s9 = ssub.s32 1, %s7
  %s10 = scalar_select 0, %s9, %s7
  loop: start=0, step=1, limit=4
  $region2: #{downsample_conv2d.1} parent=0 // loop_pre_header
    _
  $region3: #{downsample_conv2d.1} parent=0 // loop_header
    %s12 = sphi 0, %s16
    %p13 = scmp.ge.s32.totalorder %s12, 4
    %s19 = sphi 0, %s31
    %s20 = sphi 0, %s27
    %s21 = sphi 0, %s19
    %s22 = sphi 0, %s20
    %s23 = sphi 0, %s21
    %s24 = sphi 0, %s22
    %s34 = sphi 0, %s36
    %s37 = sphi 0, %s34
    %s38 = sphi 0, %s37
    %s54 = sphi 0, %s38
    %s60 = sphi 0, %s62
    %s63 = sphi 0, %s60
    %s64 = sphi 0, %s63
    %s80 = sphi 0, %s64
    %s86 = sphi 0, %s88
    %s89 = sphi 0, %s86
    %s90 = sphi 0, %s89
    %s106 = sphi 0, %s90
    %s112 = sphi 0, %s114
    %s115 = sphi 0, %s112
    %s116 = sphi 0, %s115
    %s132 = sphi 0, %s116
    %s138 = sphi 0, %s140
    %s141 = sphi 0, %s138
    %s142 = sphi 0, %s141
    %s158 = sphi 0, %s142
    %s164 = sphi 0, %s166
    %s167 = sphi 0, %s164
    %s168 = sphi 0, %s167
    %s184 = sphi 0, %s168
    %s192 = sphi 0, %s194
    %s195 = sphi 0, %s192
    %s196 = sphi 0, %s195
    %s212 = sphi 0, %s196
  $region4: #{downsample_conv2d.1} parent=0 // loop_header_branch
    %15 = sbr.rel (%p13) target = $region8
  $region5: #{downsample_conv2d.1} parent=0 // loop_body
    %s17 = ssub.s32 %s12, 1
    %s18 = ssub.s32 %s12, 2
    %s25 = sadd.s32 1, %s20
    %p26 = scmp.ge.s32.totalorder %s25, 1
    %s27 = scalar_select %p26, 0, %s25
    %s28 = sadd.s32 1, %s19
    %s29 = scalar_select %p26, %s28, %s19
    %p30 = scmp.ge.s32.totalorder %s29, 2
    %s31 = scalar_select %p30, 0, %s29
    %s32 = ssub.s32 %s19, %s31
    %p33 = scmp.eq.s32.totalorder %s32, 0
    %s35 = sadd.s32 %s34, 1
    %s36 = scalar_select %p33, %s34, %s35
    %p39 = pneg %p33
    %p40 = scmp.eq.s32.totalorder %s12, 1
    %p41 = por %p39, %p40
    %p42 = scmp.ne.s32.totalorder %s34, %s37
    %p43 = scmp.eq.s32.totalorder %s12, 0
    %p44 = por %p42, %p43
    %p45 = scmp.ne.s32.totalorder %s34, %s37
    %p46 = scmp.eq.s32.totalorder %s17, 1
    %p47 = por %p45, %p46
    %p48 = scmp.ne.s32.totalorder %s37, %s38
    %p49 = scmp.eq.s32.totalorder %s17, 0
    %p50 = por %p48, %p49
    %p51 = scmp.ne.s32.totalorder %s37, %s38
    %p52 = scmp.eq.s32.totalorder %s18, 1
    %p53 = por %p51, %p52
    %p55 = scmp.ne.s32.totalorder %s38, %s54
    %p56 = scmp.eq.s32.totalorder %s18, 0
    %p57 = por %p55, %p56
    %s58 = ssub.s32 %s19, %s31
    %p59 = scmp.eq.s32.totalorder %s58, 0
    %s61 = sadd.s32 %s60, 1
    %s62 = scalar_select %p59, %s60, %s61
    %p65 = pneg %p59
    %p66 = scmp.eq.s32.totalorder %s12, 1
    %p67 = por %p65, %p66
    %p68 = scmp.ne.s32.totalorder %s60, %s63
    %p69 = scmp.eq.s32.totalorder %s12, 0
    %p70 = por %p68, %p69
    %p71 = scmp.ne.s32.totalorder %s60, %s63
    %p72 = scmp.eq.s32.totalorder %s17, 1
    %p73 = por %p71, %p72
    %p74 = scmp.ne.s32.totalorder %s63, %s64
    %p75 = scmp.eq.s32.totalorder %s17, 0
    %p76 = por %p74, %p75
    %p77 = scmp.ne.s32.totalorder %s63, %s64
    %p78 = scmp.eq.s32.totalorder %s18, 1
    %p79 = por %p77, %p78
    %p81 = scmp.ne.s32.totalorder %s64, %s80
    %p82 = scmp.eq.s32.totalorder %s18, 0
    %p83 = por %p81, %p82
    %s84 = ssub.s32 %s19, %s31
    %p85 = scmp.eq.s32.totalorder %s84, 0
    %s87 = sadd.s32 %s86, 1
    %s88 = scalar_select %p85, %s86, %s87
    %p91 = pneg %p85
    %p92 = scmp.eq.s32.totalorder %s12, 1
    %p93 = por %p91, %p92
    %p94 = scmp.ne.s32.totalorder %s86, %s89
    %p95 = scmp.eq.s32.totalorder %s12, 0
    %p96 = por %p94, %p95
    %p97 = scmp.ne.s32.totalorder %s86, %s89
    %p98 = scmp.eq.s32.totalorder %s17, 1
    %p99 = por %p97, %p98
    %p100 = scmp.ne.s32.totalorder %s89, %s90
    %p101 = scmp.eq.s32.totalorder %s17, 0
    %p102 = por %p100, %p101
    %p103 = scmp.ne.s32.totalorder %s89, %s90
    %p104 = scmp.eq.s32.totalorder %s18, 1
    %p105 = por %p103, %p104
    %p107 = scmp.ne.s32.totalorder %s90, %s106
    %p108 = scmp.eq.s32.totalorder %s18, 0
    %p109 = por %p107, %p108
    %s110 = ssub.s32 %s19, %s31
    %p111 = scmp.eq.s32.totalorder %s110, 0
    %s113 = sadd.s32 %s112, 1
    %s114 = scalar_select %p111, %s112, %s113
    %p117 = pneg %p111
    %p118 = scmp.eq.s32.totalorder %s12, 1
    %p119 = por %p117, %p118
    %p120 = scmp.ne.s32.totalorder %s112, %s115
    %p121 = scmp.eq.s32.totalorder %s12, 0
    %p122 = por %p120, %p121
    %p123 = scmp.ne.s32.totalorder %s112, %s115
    %p124 = scmp.eq.s32.totalorder %s17, 1
    %p125 = por %p123, %p124
    %p126 = scmp.ne.s32.totalorder %s115, %s116
    %p127 = scmp.eq.s32.totalorder %s17, 0
    %p128 = por %p126, %p127
    %p129 = scmp.ne.s32.totalorder %s115, %s116
    %p130 = scmp.eq.s32.totalorder %s18, 1
    %p131 = por %p129, %p130
    %p133 = scmp.ne.s32.totalorder %s116, %s132
    %p134 = scmp.eq.s32.totalorder %s18, 0
    %p135 = por %p133, %p134
    %s136 = ssub.s32 %s20, %s27
    %p137 = scmp.eq.s32.totalorder %s136, 0
    %s139 = sadd.s32 %s138, 1
    %s140 = scalar_select %p137, %s138, %s139
    %p143 = pneg %p137
    %p144 = scmp.eq.s32.totalorder %s12, 1
    %p145 = por %p143, %p144
    %p146 = scmp.ne.s32.totalorder %s138, %s141
    %p147 = scmp.eq.s32.totalorder %s12, 0
    %p148 = por %p146, %p147
    %p149 = scmp.ne.s32.totalorder %s138, %s141
    %p150 = scmp.eq.s32.totalorder %s17, 1
    %p151 = por %p149, %p150
    %p152 = scmp.ne.s32.totalorder %s141, %s142
    %p153 = scmp.eq.s32.totalorder %s17, 0
    %p154 = por %p152, %p153
    %p155 = scmp.ne.s32.totalorder %s141, %s142
    %p156 = scmp.eq.s32.totalorder %s18, 1
    %p157 = por %p155, %p156
    %p159 = scmp.ne.s32.totalorder %s142, %s158
    %p160 = scmp.eq.s32.totalorder %s18, 0
    %p161 = por %p159, %p160
    %s162 = ssub.s32 %s20, %s27
    %p163 = scmp.eq.s32.totalorder %s162, 0
    %s165 = sadd.s32 %s164, 1
    %s166 = scalar_select %p163, %s164, %s165
    %p169 = pneg %p163
    %p170 = scmp.eq.s32.totalorder %s12, 1
    %p171 = por %p169, %p170
    %p172 = scmp.ne.s32.totalorder %s164, %s167
    %p173 = scmp.eq.s32.totalorder %s12, 0
    %p174 = por %p172, %p173
    %p175 = scmp.ne.s32.totalorder %s164, %s167
    %p176 = scmp.eq.s32.totalorder %s17, 1
    %p177 = por %p175, %p176
    %p178 = scmp.ne.s32.totalorder %s167, %s168
    %p179 = scmp.eq.s32.totalorder %s17, 0
    %p180 = por %p178, %p179
    %p181 = scmp.ne.s32.totalorder %s167, %s168
    %p182 = scmp.eq.s32.totalorder %s18, 1
    %p183 = por %p181, %p182
    %p185 = scmp.ne.s32.totalorder %s168, %s184
    %p186 = scmp.eq.s32.totalorder %s18, 0
    %p187 = por %p185, %p186
    %s188 = ssub.s32 %s19, %s31
    %s189 = ssub.s32 %s20, %s27
    %s190 = sor.u32 %s188, %s189
    %p191 = scmp.eq.s32.totalorder %s190, 0
    %s193 = sadd.s32 %s192, 1
    %s194 = scalar_select %p191, %s192, %s193
    %p197 = pneg %p191
    %p198 = scmp.eq.s32.totalorder %s12, 1
    %p199 = por %p197, %p198
    %p200 = scmp.ne.s32.totalorder %s192, %s195
    %p201 = scmp.eq.s32.totalorder %s12, 0
    %p202 = por %p200, %p201
    %p203 = scmp.ne.s32.totalorder %s192, %s195
    %p204 = scmp.eq.s32.totalorder %s17, 1
    %p205 = por %p203, %p204
    %p206 = scmp.ne.s32.totalorder %s195, %s196
    %p207 = scmp.eq.s32.totalorder %s17, 0
    %p208 = por %p206, %p207
    %p209 = scmp.ne.s32.totalorder %s195, %s196
    %p210 = scmp.eq.s32.totalorder %s18, 1
    %p211 = por %p209, %p210
    %p213 = scmp.ne.s32.totalorder %s196, %s212
    %p214 = scmp.eq.s32.totalorder %s18, 0
    %p215 = por %p213, %p214
    %p216 = scmp.le.s32.totalorder 1, %s12
    %p217 = scmp.lt.s32.totalorder %s12, 3
    %p218 = pnand %p216, %p217
    %p219 = pneg %p218
    // Predicated region
    $region9: #{downsample_conv2d.1} parent=5 // pred_check
      _
    $region10: #{downsample_conv2d.1} parent=5 // pred_check_branch
      %221 = sbr.rel (%p218) target = $region12
    $region11: #{downsample_conv2d.1} parent=5 // pred_region
      %s222 = ssub.s32 %s12, 1
      // Predicated region
      $region13: #{downsample_conv2d.1} parent=11 // pred_check
        %p223 = pneg %p154
      $region14: #{downsample_conv2d.1} parent=11 // pred_check_branch
        %225 = sbr.rel (%p223) target = $region16
      $region15: #{downsample_conv2d.1} parent=11 // pred_region
        %p226 = scmp.lt.s32.totalorder %s22, 0
        %s227 = scalar_select %p226, %s22, 0
        %s228 = smul.addr %s227, 4
        %s229 = scalar_lea.vmem %s4, %s228
      $region16: #{downsample_conv2d.1} parent=11 // pred_fallthru
        _
      // Predicated region
      $region17: #{downsample_conv2d.1} parent=11 // pred_check
        %p230 = pneg %p180
      $region18: #{downsample_conv2d.1} parent=11 // pred_check_branch
        %232 = sbr.rel (%p230) target = $region20
      $region19: #{downsample_conv2d.1} parent=11 // pred_region
        %p233 = scmp.lt.s32.totalorder %s22, 0
        %s234 = scalar_select %p233, %s22, 0
        %s235 = scalar_lea.vmem %s5, %s234
      $region20: #{downsample_conv2d.1} parent=11 // pred_fallthru
        _
    $region12: #{downsample_conv2d.1} parent=5 // pred_fallthru
      _
    %p236 = scmp.lt.s32.totalorder %s12, 2
    // Predicated region
    $region21: #{downsample_conv2d.1} parent=5 // pred_check
      %p237 = pneg %p236
    $region22: #{downsample_conv2d.1} parent=5 // pred_check_branch
      %239 = sbr.rel (%p237) target = $region24
    $region23: #{downsample_conv2d.1} parent=5 // pred_region
      // Predicated region
      $region25: #{downsample_conv2d.1} parent=23 // pred_check
        %p240 = pneg %p44
      $region26: #{downsample_conv2d.1} parent=23 // pred_check_branch
        %242 = sbr.rel (%p240) target = $region28
      $region27: #{downsample_conv2d.1} parent=23 // pred_region
        %p243 = scmp.lt.s32.totalorder %s19, 1
        %s244 = scalar_select %p243, %s19, 1
        %s245 = smul.addr %s244, 18
        %s246 = smul.addr %s245, 8
        %s247 = scalar_lea.vmem %s0, %s246
      $region28: #{downsample_conv2d.1} parent=23 // pred_fallthru
        _
      // Predicated region
      $region29: #{downsample_conv2d.1} parent=23 // pred_check
        %p248 = pneg %p70
      $region30: #{downsample_conv2d.1} parent=23 // pred_check_branch
        %250 = sbr.rel (%p248) target = $region32
      $region31: #{downsample_conv2d.1} parent=23 // pred_region
        %p251 = scmp.lt.s32.totalorder %s19, 1
        %s252 = scalar_select %p251, %s19, 1
        %s253 = smul.addr %s252, 18
        %s254 = smul.addr %s253, 8
        %s255 = scalar_lea.vmem %s1, %s254
      $region32: #{downsample_conv2d.1} parent=23 // pred_fallthru
        _
      // Predicated region
      $region33: #{downsample_conv2d.1} parent=23 // pred_check
        %p256 = pneg %p96
      $region34: #{downsample_conv2d.1} parent=23 // pred_check_branch
        %258 = sbr.rel (%p256) target = $region36
      $region35: #{downsample_conv2d.1} parent=23 // pred_region
        %p259 = scmp.lt.s32.totalorder %s19, 1
        %s260 = scalar_select %p259, %s19, 1
        %s261 = smul.addr %s260, 18
        %s262 = smul.addr %s261, 8
        %s263 = scalar_lea.vmem %s2, %s262
      $region36: #{downsample_conv2d.1} parent=23 // pred_fallthru
        _
      // Predicated region
      $region37: #{downsample_conv2d.1} parent=23 // pred_check
        %p264 = pneg %p122
      $region38: #{downsample_conv2d.1} parent=23 // pred_check_branch
        %266 = sbr.rel (%p264) target = $region40
      $region39: #{downsample_conv2d.1} parent=23 // pred_region
        %p267 = scmp.lt.s32.totalorder %s19, 1
        %s268 = scalar_select %p267, %s19, 1
        %s269 = smul.addr %s268, 18
        %s270 = smul.addr %s269, 8
        %s271 = scalar_lea.vmem %s3, %s270
      $region40: #{downsample_conv2d.1} parent=23 // pred_fallthru
        _
    $region24: #{downsample_conv2d.1} parent=5 // pred_fallthru
      _
    %p272 = scmp.le.s32.totalorder 1, %s12
    %p273 = scmp.lt.s32.totalorder %s12, 3
    %p274 = pnand %p272, %p273
    %p275 = pneg %p274
    // Predicated region
    $region41: #{downsample_conv2d.1} parent=5 // pred_check
      _
    $region42: #{downsample_conv2d.1} parent=5 // pred_check_branch
      %277 = sbr.rel (%p274) target = $region44
    $region43: #{downsample_conv2d.1} parent=5 // pred_region
      %s278 = ssub.s32 %s12, 1
      %p279 = scmp.lt.s32.totalorder %s21, 1
      %s280 = scalar_select %p279, %s21, 1
      %s281 = smul.addr %s280, 18
      %s282 = smul.addr %s281, 8
      %s283 = scalar_lea.vmem %s0, %s282
      %p284 = pneg %p50
      %p285 = pneg %p47
      %p286 = scmp.lt.s32.totalorder %s21, 1
      %s287 = scalar_select %p286, %s21, 1
      %s288 = smul.addr %s287, 18
      %s289 = smul.addr %s288, 8
      %s290 = scalar_lea.vmem %s1, %s289
      %p291 = pneg %p76
      %p292 = pneg %p73
      %p293 = scmp.lt.s32.totalorder %s21, 1
      %s294 = scalar_select %p293, %s21, 1
      %s295 = smul.addr %s294, 18
      %s296 = smul.addr %s295, 8
      %s297 = scalar_lea.vmem %s2, %s296
      %p298 = pneg %p102
      %p299 = pneg %p99
      %p300 = scmp.lt.s32.totalorder %s21, 1
      %s301 = scalar_select %p300, %s21, 1
      %s302 = smul.addr %s301, 18
      %s303 = smul.addr %s302, 8
      %s304 = scalar_lea.vmem %s3, %s303
      %p305 = pneg %p128
      %p306 = pneg %p125
      %p307 = scmp.lt.s32.totalorder %s22, 0
      %s308 = scalar_select %p307, %s22, 0
      %s309 = smul.addr %s308, 4
      %s310 = scalar_lea.vmem %s4, %s309
      %p311 = pneg %p154
      %p312 = pneg %p151
      %p313 = scmp.lt.s32.totalorder %s22, 0
      %s314 = scalar_select %p313, %s22, 0
      %s315 = scalar_lea.vmem %s5, %s314
      %p316 = pneg %p180
      %p317 = pneg %p177
      %p318 = pneg %p208
      %p319 = pneg %p205
      %p320 = scmp.lt.s32.totalorder %s21, 1
      %s321 = scalar_select %p320, %s21, 1
      %p322 = scmp.lt.s32.totalorder %s22, 0
      %s323 = scalar_select %p322, %s22, 0
      %s324 = smul.addr %s321, 8
      %s325 = sadd.s32 %s323, %s324
      %s326 = smul.addr %s325, 8
      %s327 = scalar_lea.vmem %s6, %s326
      %p328 = scmp.lt.s32.totalorder %s21, 1
      %s329 = scalar_select %p328, %s21, 1
      %s330 = smul.addr %s329, 18
      %s331 = smul.addr %s330, 8
      %s332 = scalar_lea.vmem %s0, %s331
      %p333 = scmp.lt.s32.totalorder %s21, 1
      %s334 = scalar_select %p333, %s21, 1
      %s335 = smul.addr %s334, 18
      %s336 = smul.addr %s335, 8
      %s337 = scalar_lea.vmem %s1, %s336
      %p338 = scmp.lt.s32.totalorder %s21, 1
      %s339 = scalar_select %p338, %s21, 1
      %s340 = smul.addr %s339, 18
      %s341 = smul.addr %s340, 8
      %s342 = scalar_lea.vmem %s2, %s341
      %p343 = scmp.lt.s32.totalorder %s21, 1
      %s344 = scalar_select %p343, %s21, 1
      %s345 = smul.addr %s344, 18
      %s346 = smul.addr %s345, 8
      %s347 = scalar_lea.vmem %s3, %s346
      %p348 = scmp.lt.s32.totalorder %s22, 0
      %s349 = scalar_select %p348, %s22, 0
      %s350 = smul.addr %s349, 4
      %s351 = scalar_lea.vmem %s4, %s350
      %p352 = scmp.lt.s32.totalorder %s22, 0
      %s353 = scalar_select %p352, %s22, 0
      %s354 = scalar_lea.vmem %s5, %s353
      %p355 = scmp.lt.s32.totalorder %s21, 1
      %s356 = scalar_select %p355, %s21, 1
      %p357 = scmp.lt.s32.totalorder %s22, 0
      %s358 = scalar_select %p357, %s22, 0
      %s359 = smul.addr %s356, 8
      %s360 = sadd.s32 %s358, %s359
      %s361 = smul.addr %s360, 8
      %s362 = scalar_lea.vmem %s6, %s361
      %p363 = scmp.eq.s32.totalorder %s22, 0
      // Predicated region
      $region45: #{downsample_conv2d.1} parent=43 // pred_check
        %p364 = pneg %p363
      $region46: #{downsample_conv2d.1} parent=43 // pred_check_branch
        %366 = sbr.rel (%p364) target = $region48
      $region47: #{downsample_conv2d.1} parent=43 // pred_region
        %v367 = vld [vmem:[%s332] sm:$0xff]
        %v368 = vld [vmem:[%s332 + $0x10] sm:$0xff]
        %v369 = vld [vmem:[%s332 + $0x20] sm:$0xff]
        %v370 = vld [vmem:[%s332 + $0x30] sm:$0xff]
        %v371 = vld [vmem:[%s332 + $0x40] sm:$0xff]
        %v372 = vld [vmem:[%s332 + $0x50] sm:$0xff]
        %v373 = vld [vmem:[%s332 + $0x60] sm:$0xff]
        %v374 = vld [vmem:[%s332 + $0x70] sm:$0xff]
        %vm375 = vcmask 31744
        %376 = vst.msk [vmem:[#allocation2] sm:$0xff] %vm375, %v367
        %377 = vst.msk [vmem:[#allocation2 + $0x8] sm:$0xff] %vm375, %v368
        %378 = vst.msk [vmem:[#allocation2 + $0x10] sm:$0xff] %vm375, %v369
        %379 = vst.msk [vmem:[#allocation2 + $0x18] sm:$0xff] %vm375, %v370
        %380 = vst.msk [vmem:[#allocation2 + $0x20] sm:$0xff] %vm375, %v371
        %381 = vst.msk [vmem:[#allocation2 + $0x28] sm:$0xff] %vm375, %v372
        %382 = vst.msk [vmem:[#allocation2 + $0x30] sm:$0xff] %vm375, %v373
        %383 = vst.msk [vmem:[#allocation2 + $0x38] sm:$0xff] %vm375, %v374
        %v384 = vld [vmem:[%s337] sm:$0xff]
        %v385 = vld [vmem:[%s337 + $0x10] sm:$0xff]
        %v386 = vld [vmem:[%s337 + $0x20] sm:$0xff]
        %v387 = vld [vmem:[%s337 + $0x30] sm:$0xff]
        %v388 = vld [vmem:[%s337 + $0x40] sm:$0xff]
        %v389 = vld [vmem:[%s337 + $0x50] sm:$0xff]
        %v390 = vld [vmem:[%s337 + $0x60] sm:$0xff]
        %v391 = vld [vmem:[%s337 + $0x70] sm:$0xff]
        %s392 = scalar_lea.vmem [#allocation2], 64
        %393 = vst.msk [vmem:[%s392] sm:$0xff] %vm375, %v384
        %394 = vst.msk [vmem:[%s392 + $0x8] sm:$0xff] %vm375, %v385
        %395 = vst.msk [vmem:[%s392 + $0x10] sm:$0xff] %vm375, %v386
        %396 = vst.msk [vmem:[%s392 + $0x18] sm:$0xff] %vm375, %v387
        %397 = vst.msk [vmem:[%s392 + $0x20] sm:$0xff] %vm375, %v388
        %398 = vst.msk [vmem:[%s392 + $0x28] sm:$0xff] %vm375, %v389
        %399 = vst.msk [vmem:[%s392 + $0x30] sm:$0xff] %vm375, %v390
        %400 = vst.msk [vmem:[%s392 + $0x38] sm:$0xff] %vm375, %v391
        %v401 = vld [vmem:[%s332 + $0x1] sm:$0xff]
        %v402 = vld [vmem:[%s332 + $0x11] sm:$0xff]
        %v403 = vld [vmem:[%s332 + $0x21] sm:$0xff]
        %v404 = vld [vmem:[%s332 + $0x31] sm:$0xff]
        %v405 = vld [vmem:[%s332 + $0x41] sm:$0xff]
        %v406 = vld [vmem:[%s332 + $0x51] sm:$0xff]
        %v407 = vld [vmem:[%s332 + $0x61] sm:$0xff]
        %v408 = vld [vmem:[%s332 + $0x71] sm:$0xff]
        %s409 = scalar_lea.vmem [#allocation2], 128
        %410 = vst.msk [vmem:[%s409] sm:$0xff] %vm375, %v401
        %411 = vst.msk [vmem:[%s409 + $0x8] sm:$0xff] %vm375, %v402
        %412 = vst.msk [vmem:[%s409 + $0x10] sm:$0xff] %vm375, %v403
        %413 = vst.msk [vmem:[%s409 + $0x18] sm:$0xff] %vm375, %v404
        %414 = vst.msk [vmem:[%s409 + $0x20] sm:$0xff] %vm375, %v405
        %415 = vst.msk [vmem:[%s409 + $0x28] sm:$0xff] %vm375, %v406
        %416 = vst.msk [vmem:[%s409 + $0x30] sm:$0xff] %vm375, %v407
        %417 = vst.msk [vmem:[%s409 + $0x38] sm:$0xff] %vm375, %v408
        %v418 = vld [vmem:[%s342] sm:$0xff]
        %v419 = vld [vmem:[%s342 + $0x10] sm:$0xff]
        %v420 = vld [vmem:[%s342 + $0x20] sm:$0xff]
        %v421 = vld [vmem:[%s342 + $0x30] sm:$0xff]
        %v422 = vld [vmem:[%s342 + $0x40] sm:$0xff]
        %v423 = vld [vmem:[%s342 + $0x50] sm:$0xff]
        %v424 = vld [vmem:[%s342 + $0x60] sm:$0xff]
        %v425 = vld [vmem:[%s342 + $0x70] sm:$0xff]
        %s426 = scalar_lea.vmem [#allocation2], 192
        %427 = vst.msk [vmem:[%s426] sm:$0xff] %vm375, %v418
        %428 = vst.msk [vmem:[%s426 + $0x8] sm:$0xff] %vm375, %v419
        %429 = vst.msk [vmem:[%s426 + $0x10] sm:$0xff] %vm375, %v420
        %430 = vst.msk [vmem:[%s426 + $0x18] sm:$0xff] %vm375, %v421
        %431 = vst.msk [vmem:[%s426 + $0x20] sm:$0xff] %vm375, %v422
        %432 = vst.msk [vmem:[%s426 + $0x28] sm:$0xff] %vm375, %v423
        %433 = vst.msk [vmem:[%s426 + $0x30] sm:$0xff] %vm375, %v424
        %434 = vst.msk [vmem:[%s426 + $0x38] sm:$0xff] %vm375, %v425
        %v435 = vld [vmem:[%s347] sm:$0xff]
        %v436 = vld [vmem:[%s347 + $0x10] sm:$0xff]
        %v437 = vld [vmem:[%s347 + $0x20] sm:$0xff]
        %v438 = vld [vmem:[%s347 + $0x30] sm:$0xff]
        %v439 = vld [vmem:[%s347 + $0x40] sm:$0xff]
        %v440 = vld [vmem:[%s347 + $0x50] sm:$0xff]
        %v441 = vld [vmem:[%s347 + $0x60] sm:$0xff]
        %v442 = vld [vmem:[%s347 + $0x70] sm:$0xff]
        %s443 = scalar_lea.vmem [#allocation2], 256
        %444 = vst.msk [vmem:[%s443] sm:$0xff] %vm375, %v435
        %445 = vst.msk [vmem:[%s443 + $0x8] sm:$0xff] %vm375, %v436
        %446 = vst.msk [vmem:[%s443 + $0x10] sm:$0xff] %vm375, %v437
        %447 = vst.msk [vmem:[%s443 + $0x18] sm:$0xff] %vm375, %v438
        %448 = vst.msk [vmem:[%s443 + $0x20] sm:$0xff] %vm375, %v439
        %449 = vst.msk [vmem:[%s443 + $0x28] sm:$0xff] %vm375, %v440
        %450 = vst.msk [vmem:[%s443 + $0x30] sm:$0xff] %vm375, %v441
        %451 = vst.msk [vmem:[%s443 + $0x38] sm:$0xff] %vm375, %v442
        %v452 = vld [vmem:[%s342 + $0x1] sm:$0xff]
        %v453 = vld [vmem:[%s342 + $0x11] sm:$0xff]
        %v454 = vld [vmem:[%s342 + $0x21] sm:$0xff]
        %v455 = vld [vmem:[%s342 + $0x31] sm:$0xff]
        %v456 = vld [vmem:[%s342 + $0x41] sm:$0xff]
        %v457 = vld [vmem:[%s342 + $0x51] sm:$0xff]
        %v458 = vld [vmem:[%s342 + $0x61] sm:$0xff]
        %v459 = vld [vmem:[%s342 + $0x71] sm:$0xff]
        %s460 = scalar_lea.vmem [#allocation2], 320
        %461 = vst.msk [vmem:[%s460] sm:$0xff] %vm375, %v452
        %462 = vst.msk [vmem:[%s460 + $0x8] sm:$0xff] %vm375, %v453
        %463 = vst.msk [vmem:[%s460 + $0x10] sm:$0xff] %vm375, %v454
        %464 = vst.msk [vmem:[%s460 + $0x18] sm:$0xff] %vm375, %v455
        %465 = vst.msk [vmem:[%s460 + $0x20] sm:$0xff] %vm375, %v456
        %466 = vst.msk [vmem:[%s460 + $0x28] sm:$0xff] %vm375, %v457
        %467 = vst.msk [vmem:[%s460 + $0x30] sm:$0xff] %vm375, %v458
        %468 = vst.msk [vmem:[%s460 + $0x38] sm:$0xff] %vm375, %v459
        %s469 = scalar_lea.vmem %s332, 16
        %v470 = vld [vmem:[%s469] sm:$0xff]
        %v471 = vld [vmem:[%s469 + $0x10] sm:$0xff]
        %v472 = vld [vmem:[%s469 + $0x20] sm:$0xff]
        %v473 = vld [vmem:[%s469 + $0x30] sm:$0xff]
        %v474 = vld [vmem:[%s469 + $0x40] sm:$0xff]
        %v475 = vld [vmem:[%s469 + $0x50] sm:$0xff]
        %v476 = vld [vmem:[%s469 + $0x60] sm:$0xff]
        %v477 = vld [vmem:[%s469 + $0x70] sm:$0xff]
        %s478 = scalar_lea.vmem [#allocation2], 384
        %479 = vst.msk [vmem:[%s478] sm:$0xff] %vm375, %v470
        %480 = vst.msk [vmem:[%s478 + $0x8] sm:$0xff] %vm375, %v471
        %481 = vst.msk [vmem:[%s478 + $0x10] sm:$0xff] %vm375, %v472
        %482 = vst.msk [vmem:[%s478 + $0x18] sm:$0xff] %vm375, %v473
        %483 = vst.msk [vmem:[%s478 + $0x20] sm:$0xff] %vm375, %v474
        %484 = vst.msk [vmem:[%s478 + $0x28] sm:$0xff] %vm375, %v475
        %485 = vst.msk [vmem:[%s478 + $0x30] sm:$0xff] %vm375, %v476
        %486 = vst.msk [vmem:[%s478 + $0x38] sm:$0xff] %vm375, %v477
        %s487 = scalar_lea.vmem %s337, 16
        %v488 = vld [vmem:[%s487] sm:$0xff]
        %v489 = vld [vmem:[%s487 + $0x10] sm:$0xff]
        %v490 = vld [vmem:[%s487 + $0x20] sm:$0xff]
        %v491 = vld [vmem:[%s487 + $0x30] sm:$0xff]
        %v492 = vld [vmem:[%s487 + $0x40] sm:$0xff]
        %v493 = vld [vmem:[%s487 + $0x50] sm:$0xff]
        %v494 = vld [vmem:[%s487 + $0x60] sm:$0xff]
        %v495 = vld [vmem:[%s487 + $0x70] sm:$0xff]
        %s496 = scalar_lea.vmem [#allocation2], 448
        %497 = vst.msk [vmem:[%s496] sm:$0xff] %vm375, %v488
        %498 = vst.msk [vmem:[%s496 + $0x8] sm:$0xff] %vm375, %v489
        %499 = vst.msk [vmem:[%s496 + $0x10] sm:$0xff] %vm375, %v490
        %500 = vst.msk [vmem:[%s496 + $0x18] sm:$0xff] %vm375, %v491
        %501 = vst.msk [vmem:[%s496 + $0x20] sm:$0xff] %vm375, %v492
        %502 = vst.msk [vmem:[%s496 + $0x28] sm:$0xff] %vm375, %v493
        %503 = vst.msk [vmem:[%s496 + $0x30] sm:$0xff] %vm375, %v494
        %504 = vst.msk [vmem:[%s496 + $0x38] sm:$0xff] %vm375, %v495
        %v505 = vld [vmem:[%s469 + $0x1] sm:$0xff]
        %v506 = vld [vmem:[%s469 + $0x11] sm:$0xff]
        %v507 = vld [vmem:[%s469 + $0x21] sm:$0xff]
        %v508 = vld [vmem:[%s469 + $0x31] sm:$0xff]
        %v509 = vld [vmem:[%s469 + $0x41] sm:$0xff]
        %v510 = vld [vmem:[%s469 + $0x51] sm:$0xff]
        %v511 = vld [vmem:[%s469 + $0x61] sm:$0xff]
        %v512 = vld [vmem:[%s469 + $0x71] sm:$0xff]
        %s513 = scalar_lea.vmem [#allocation2], 512
        %514 = vst.msk [vmem:[%s513] sm:$0xff] %vm375, %v505
        %515 = vst.msk [vmem:[%s513 + $0x8] sm:$0xff] %vm375, %v506
        %516 = vst.msk [vmem:[%s513 + $0x10] sm:$0xff] %vm375, %v507
        %517 = vst.msk [vmem:[%s513 + $0x18] sm:$0xff] %vm375, %v508
        %518 = vst.msk [vmem:[%s513 + $0x20] sm:$0xff] %vm375, %v509
        %519 = vst.msk [vmem:[%s513 + $0x28] sm:$0xff] %vm375, %v510
        %520 = vst.msk [vmem:[%s513 + $0x30] sm:$0xff] %vm375, %v511
        %521 = vst.msk [vmem:[%s513 + $0x38] sm:$0xff] %vm375, %v512
      $region48: #{downsample_conv2d.1} parent=43 // pred_fallthru
        _
      %v522 = vld [vmem:[%s354] sm:$0x1]
      %v524 = vlaneseq
      %v525 = vshrl.u32 %v524, 7
      %v526 = vsub.s32 0, %v525
      %v527 = vrot.slane %v522, %v526
      %v529 = vld [vmem:[#allocation2] sm:$0xff]
      %v530 = vld [vmem:[#allocation2 + $0x8] sm:$0xff]
      %v531 = vld [vmem:[#allocation2 + $0x10] sm:$0xff]
      %v532 = vld [vmem:[#allocation2 + $0x18] sm:$0xff]
      %v533 = vld [vmem:[#allocation2 + $0x20] sm:$0xff]
      %v534 = vld [vmem:[#allocation2 + $0x28] sm:$0xff]
      %v535 = vld [vmem:[#allocation2 + $0x30] sm:$0xff]
      %v536 = vld [vmem:[#allocation2 + $0x38] sm:$0xff]
      %v537 = vld [vmem:[%s351] sm:$0xf]
      %vm538 = vcmask 31744
      %v540 = vsel %vm538, %v529, 0
      %v543 = vsel %vm538, %v530, 0
      %v546 = vsel %vm538, %v531, 0
      %v549 = vsel %vm538, %v532, 0
      %v552 = vsel %vm538, %v533, 0
      %v555 = vsel %vm538, %v534, 0
      %v558 = vsel %vm538, %v535, 0
      %v561 = vsel %vm538, %v536, 0
      %vm563 = vcmask 1043456
      %v565 = vsel %vm563, %v537, 0
      %567 = vmatprep.subr.mxu0 0.0
      %568 = vmatpush1.msra.mxu0 0.0
      %569 = vmatprep.subr.mxu0 0.0
      %570 = vmatpush1.msra.mxu0 0.0
      %571 = vmatprep.subr.mxu0 0.0
      %572 = vmatpush1.msra.mxu0 0.0
      %573 = vmatprep.subr.mxu0 0.0
      %574 = vmatpush1.msra.mxu0 0.0
      %575 = vmatprep.subr.mxu0 0.0
      %576 = vmatpush1.msra.mxu0 0.0
      %577 = vmatprep.subr.mxu0 0.0
      %578 = vmatpush1.msra.mxu0 0.0
      %579 = vmatprep.subr.mxu0 0.0
      %580 = vmatpush1.msra.mxu0 0.0
      %581 = vmatprep.subr.mxu0 0.0
      %582 = vmatpush1.msra.mxu0 0.0
      %583 = vmatprep.subr.mxu0 0.0
      %584 = vmatpush1.msra.mxu0 0.0
      %585 = vmatprep.subr.mxu0 0.0
      %586 = vmatpush1.msra.mxu0 0.0
      %587 = vmatprep.subr.mxu0 0.0
      %588 = vmatpush1.msra.mxu0 0.0
      %589 = vmatprep.subr.mxu0 0.0
      %590 = vmatpush1.msra.mxu0 0.0
      %591 = vmatprep.subr.mxu0 0.0
      %592 = vmatpush1.msra.mxu0 0.0
      %593 = vmatprep.subr.mxu0 0.0
      %594 = vmatpush1.msra.mxu0 0.0
      %595 = vmatprep.subr.mxu0 0.0
      %596 = vmatpush1.msra.mxu0 0.0
      %597 = vmatprep.subr.mxu0 0.0
      %598 = vmatpush1.msra.mxu0 %v565
      %599 = vmatprep.subr.mxu0 0.0
      %600 = vmatpush2.msra.mxu0 0.0
      %601 = vmatprep.subr.mxu0 0.0
      %602 = vmatpush2.msra.mxu0 0.0
      %603 = vmatprep.subr.mxu0 0.0
      %604 = vmatpush2.msra.mxu0 0.0
      %605 = vmatprep.subr.mxu0 0.0
      %606 = vmatpush2.msra.mxu0 0.0
      %607 = vmatprep.subr.mxu0 0.0
      %608 = vmatpush2.msra.mxu0 0.0
      %609 = vmatprep.subr.mxu0 0.0
      %610 = vmatpush2.msra.mxu0 0.0
      %611 = vmatprep.subr.mxu0 0.0
      %612 = vmatpush2.msra.mxu0 0.0
      %613 = vmatprep.subr.mxu0 0.0
      %614 = vmatpush2.msra.mxu0 0.0
      %615 = vmatprep.subr.mxu0 0.0
      %616 = vmatpush2.msra.mxu0 0.0
      %617 = vmatprep.subr.mxu0 0.0
      %618 = vmatpush2.msra.mxu0 0.0
      %619 = vmatprep.subr.mxu0 0.0
      %620 = vmatpush2.msra.mxu0 0.0
      %621 = vmatprep.subr.mxu0 0.0
      %622 = vmatpush2.msra.mxu0 0.0
      %623 = vmatprep.subr.mxu0 0.0
      %624 = vmatpush2.msra.mxu0 0.0
      %625 = vmatprep.subr.mxu0 0.0
      %626 = vmatpush2.msra.mxu0 0.0
      %627 = vmatprep.subr.mxu0 0.0
      %628 = vmatpush2.msra.mxu0 0.0
      %629 = vmatprep.subr.mxu0 0.0
      %630 = vmatpush2.msra.mxu0 0.0
      %631 = vmatprep.mubr.f32.mxu0 0.0
      %632 = vmatmul.mubr.f32.gmra.mxu0 %v540
      %v633 = vpop.f32.mrf.mxu0
      %v634 = vadd.f32 0.0, %v633
      %v635 = vpop.f32.mrf.mxu0
      %636 = vmatprep.mubr.f32.mxu0 0.0
      %637 = vmatmul.mubr.f32.gmra.mxu0 %v543
      %v638 = vpop.f32.mrf.mxu0
      %v639 = vadd.f32 0.0, %v638
      %v640 = vpop.f32.mrf.mxu0
      %641 = vmatprep.mubr.f32.mxu0 0.0
      %642 = vmatmul.mubr.f32.gmra.mxu0 %v546
      %v643 = vpop.f32.mrf.mxu0
      %v644 = vadd.f32 0.0, %v643
      %v645 = vpop.f32.mrf.mxu0
      %646 = vmatprep.mubr.f32.mxu0 0.0
      %647 = vmatmul.mubr.f32.gmra.mxu0 %v549
      %v648 = vpop.f32.mrf.mxu0
      %v649 = vadd.f32 0.0, %v648
      %v650 = vpop.f32.mrf.mxu0
      %651 = vmatprep.mubr.f32.mxu0 0.0
      %652 = vmatmul.mubr.f32.gmra.mxu0 %v552
      %v653 = vpop.f32.mrf.mxu0
      %v654 = vadd.f32 0.0, %v653
      %v655 = vpop.f32.mrf.mxu0
      %656 = vmatprep.mubr.f32.mxu0 0.0
      %657 = vmatmul.mubr.f32.gmra.mxu0 %v555
      %v658 = vpop.f32.mrf.mxu0
      %v659 = vadd.f32 0.0, %v658
      %v660 = vpop.f32.mrf.mxu0
      %661 = vmatprep.mubr.f32.mxu0 0.0
      %662 = vmatmul.mubr.f32.gmra.mxu0 %v558
      %v663 = vpop.f32.mrf.mxu0
      %v664 = vadd.f32 0.0, %v663
      %v665 = vpop.f32.mrf.mxu0
      %666 = vmatprep.mubr.f32.mxu0 0.0
      %667 = vmatmul.mubr.f32.gmra.mxu0 %v561
      %v668 = vpop.f32.mrf.mxu0
      %v669 = vadd.f32 0.0, %v668
      %v670 = vpop.f32.mrf.mxu0
      %671 = vdwg.mxu0
      %v672 = vadd.f32 %v527, %v634
      %v673 = vadd.f32 %v527, %v639
      %v674 = vadd.f32 %v527, %v644
      %v675 = vadd.f32 %v527, %v649
      %v676 = vadd.f32 %v527, %v654
      %v677 = vadd.f32 %v527, %v659
      %v678 = vadd.f32 %v527, %v664
      %v679 = vadd.f32 %v527, %v669
      %s680 = scalar_lea.vmem [#allocation2], 64
      %v681 = vld [vmem:[%s680] sm:$0xff]
      %v682 = vld [vmem:[%s680 + $0x8] sm:$0xff]
      %v683 = vld [vmem:[%s680 + $0x10] sm:$0xff]
      %v684 = vld [vmem:[%s680 + $0x18] sm:$0xff]
      %v685 = vld [vmem:[%s680 + $0x20] sm:$0xff]
      %v686 = vld [vmem:[%s680 + $0x28] sm:$0xff]
      %v687 = vld [vmem:[%s680 + $0x30] sm:$0xff]
      %v688 = vld [vmem:[%s680 + $0x38] sm:$0xff]
      %s689 = scalar_lea.vmem %s351, 4
      %v690 = vld [vmem:[%s689] sm:$0xf]
      %v692 = vsel %vm538, %v681, 0
      %v695 = vsel %vm538, %v682, 0
      %v698 = vsel %vm538, %v683, 0
      %v701 = vsel %vm538, %v684, 0
      %v704 = vsel %vm538, %v685, 0
      %v707 = vsel %vm538, %v686, 0
      %v710 = vsel %vm538, %v687, 0
      %v713 = vsel %vm538, %v688, 0
      %v716 = vsel %vm563, %v690, 0
      %718 = vmatprep.subr.mxu0 0.0
      %719 = vmatpush1.msra.mxu0 0.0
      %720 = vmatprep.subr.mxu0 0.0
      %721 = vmatpush1.msra.mxu0 0.0
      %722 = vmatprep.subr.mxu0 0.0
      %723 = vmatpush1.msra.mxu0 0.0
      %724 = vmatprep.subr.mxu0 0.0
      %725 = vmatpush1.msra.mxu0 0.0
      %726 = vmatprep.subr.mxu0 0.0
      %727 = vmatpush1.msra.mxu0 0.0
      %728 = vmatprep.subr.mxu0 0.0
      %729 = vmatpush1.msra.mxu0 0.0
      %730 = vmatprep.subr.mxu0 0.0
      %731 = vmatpush1.msra.mxu0 0.0
      %732 = vmatprep.subr.mxu0 0.0
      %733 = vmatpush1.msra.mxu0 0.0
      %734 = vmatprep.subr.mxu0 0.0
      %735 = vmatpush1.msra.mxu0 0.0
      %736 = vmatprep.subr.mxu0 0.0
      %737 = vmatpush1.msra.mxu0 0.0
      %738 = vmatprep.subr.mxu0 0.0
      %739 = vmatpush1.msra.mxu0 0.0
      %740 = vmatprep.subr.mxu0 0.0
      %741 = vmatpush1.msra.mxu0 0.0
      %742 = vmatprep.subr.mxu0 0.0
      %743 = vmatpush1.msra.mxu0 0.0
      %744 = vmatprep.subr.mxu0 0.0
      %745 = vmatpush1.msra.mxu0 0.0
      %746 = vmatprep.subr.mxu0 0.0
      %747 = vmatpush1.msra.mxu0 0.0
      %748 = vmatprep.subr.mxu0 0.0
      %749 = vmatpush1.msra.mxu0 %v716
      %750 = vmatprep.subr.mxu0 0.0
      %751 = vmatpush2.msra.mxu0 0.0
      %752 = vmatprep.subr.mxu0 0.0
      %753 = vmatpush2.msra.mxu0 0.0
      %754 = vmatprep.subr.mxu0 0.0
      %755 = vmatpush2.msra.mxu0 0.0
      %756 = vmatprep.subr.mxu0 0.0
      %757 = vmatpush2.msra.mxu0 0.0
      %758 = vmatprep.subr.mxu0 0.0
      %759 = vmatpush2.msra.mxu0 0.0
      %760 = vmatprep.subr.mxu0 0.0
      %761 = vmatpush2.msra.mxu0 0.0
      %762 = vmatprep.subr.mxu0 0.0
      %763 = vmatpush2.msra.mxu0 0.0
      %764 = vmatprep.subr.mxu0 0.0
      %765 = vmatpush2.msra.mxu0 0.0
      %766 = vmatprep.subr.mxu0 0.0
      %767 = vmatpush2.msra.mxu0 0.0
      %768 = vmatprep.subr.mxu0 0.0
      %769 = vmatpush2.msra.mxu0 0.0
      %770 = vmatprep.subr.mxu0 0.0
      %771 = vmatpush2.msra.mxu0 0.0
      %772 = vmatprep.subr.mxu0 0.0
      %773 = vmatpush2.msra.mxu0 0.0
      %774 = vmatprep.subr.mxu0 0.0
      %775 = vmatpush2.msra.mxu0 0.0
      %776 = vmatprep.subr.mxu0 0.0
      %777 = vmatpush2.msra.mxu0 0.0
      %778 = vmatprep.subr.mxu0 0.0
      %779 = vmatpush2.msra.mxu0 0.0
      %780 = vmatprep.subr.mxu0 0.0
      %781 = vmatpush2.msra.mxu0 0.0
      %782 = vmatprep.mubr.f32.mxu0 0.0
      %783 = vmatmul.mubr.f32.gmra.mxu0 %v692
      %v784 = vpop.f32.mrf.mxu0
      %v785 = vadd.f32 0.0, %v784
      %v786 = vpop.f32.mrf.mxu0
      %787 = vmatprep.mubr.f32.mxu0 0.0
      %788 = vmatmul.mubr.f32.gmra.mxu0 %v695
      %v789 = vpop.f32.mrf.mxu0
      %v790 = vadd.f32 0.0, %v789
      %v791 = vpop.f32.mrf.mxu0
      %792 = vmatprep.mubr.f32.mxu0 0.0
      %793 = vmatmul.mubr.f32.gmra.mxu0 %v698
      %v794 = vpop.f32.mrf.mxu0
      %v795 = vadd.f32 0.0, %v794
      %v796 = vpop.f32.mrf.mxu0
      %797 = vmatprep.mubr.f32.mxu0 0.0
      %798 = vmatmul.mubr.f32.gmra.mxu0 %v701
      %v799 = vpop.f32.mrf.mxu0
      %v800 = vadd.f32 0.0, %v799
      %v801 = vpop.f32.mrf.mxu0
      %802 = vmatprep.mubr.f32.mxu0 0.0
      %803 = vmatmul.mubr.f32.gmra.mxu0 %v704
      %v804 = vpop.f32.mrf.mxu0
      %v805 = vadd.f32 0.0, %v804
      %v806 = vpop.f32.mrf.mxu0
      %807 = vmatprep.mubr.f32.mxu0 0.0
      %808 = vmatmul.mubr.f32.gmra.mxu0 %v707
      %v809 = vpop.f32.mrf.mxu0
      %v810 = vadd.f32 0.0, %v809
      %v811 = vpop.f32.mrf.mxu0
      %812 = vmatprep.mubr.f32.mxu0 0.0
      %813 = vmatmul.mubr.f32.gmra.mxu0 %v710
      %v814 = vpop.f32.mrf.mxu0
      %v815 = vadd.f32 0.0, %v814
      %v816 = vpop.f32.mrf.mxu0
      %817 = vmatprep.mubr.f32.mxu0 0.0
      %818 = vmatmul.mubr.f32.gmra.mxu0 %v713
      %v819 = vpop.f32.mrf.mxu0
      %v820 = vadd.f32 0.0, %v819
      %v821 = vpop.f32.mrf.mxu0
      %822 = vdwg.mxu0
      %v823 = vadd.f32 %v672, %v785
      %v824 = vadd.f32 %v673, %v790
      %v825 = vadd.f32 %v674, %v795
      %v826 = vadd.f32 %v675, %v800
      %v827 = vadd.f32 %v676, %v805
      %v828 = vadd.f32 %v677, %v810
      %v829 = vadd.f32 %v678, %v815
      %v830 = vadd.f32 %v679, %v820
      %s831 = scalar_lea.vmem [#allocation2], 128
      %v832 = vld [vmem:[%s831] sm:$0xff]
      %v833 = vld [vmem:[%s831 + $0x8] sm:$0xff]
      %v834 = vld [vmem:[%s831 + $0x10] sm:$0xff]
      %v835 = vld [vmem:[%s831 + $0x18] sm:$0xff]
      %v836 = vld [vmem:[%s831 + $0x20] sm:$0xff]
      %v837 = vld [vmem:[%s831 + $0x28] sm:$0xff]
      %v838 = vld [vmem:[%s831 + $0x30] sm:$0xff]
      %v839 = vld [vmem:[%s831 + $0x38] sm:$0xff]
      %s840 = scalar_lea.vmem %s351, 8
      %v841 = vld [vmem:[%s840] sm:$0xf]
      %v843 = vsel %vm538, %v832, 0
      %v846 = vsel %vm538, %v833, 0
      %v849 = vsel %vm538, %v834, 0
      %v852 = vsel %vm538, %v835, 0
      %v855 = vsel %vm538, %v836, 0
      %v858 = vsel %vm538, %v837, 0
      %v861 = vsel %vm538, %v838, 0
      %v864 = vsel %vm538, %v839, 0
      %v867 = vsel %vm563, %v841, 0
      %869 = vmatprep.subr.mxu0 0.0
      %870 = vmatpush1.msra.mxu0 0.0
      %871 = vmatprep.subr.mxu0 0.0
      %872 = vmatpush1.msra.mxu0 0.0
      %873 = vmatprep.subr.mxu0 0.0
      %874 = vmatpush1.msra.mxu0 0.0
      %875 = vmatprep.subr.mxu0 0.0
      %876 = vmatpush1.msra.mxu0 0.0
      %877 = vmatprep.subr.mxu0 0.0
      %878 = vmatpush1.msra.mxu0 0.0
      %879 = vmatprep.subr.mxu0 0.0
      %880 = vmatpush1.msra.mxu0 0.0
      %881 = vmatprep.subr.mxu0 0.0
      %882 = vmatpush1.msra.mxu0 0.0
      %883 = vmatprep.subr.mxu0 0.0
      %884 = vmatpush1.msra.mxu0 0.0
      %885 = vmatprep.subr.mxu0 0.0
      %886 = vmatpush1.msra.mxu0 0.0
      %887 = vmatprep.subr.mxu0 0.0
      %888 = vmatpush1.msra.mxu0 0.0
      %889 = vmatprep.subr.mxu0 0.0
      %890 = vmatpush1.msra.mxu0 0.0
      %891 = vmatprep.subr.mxu0 0.0
      %892 = vmatpush1.msra.mxu0 0.0
      %893 = vmatprep.subr.mxu0 0.0
      %894 = vmatpush1.msra.mxu0 0.0
      %895 = vmatprep.subr.mxu0 0.0
      %896 = vmatpush1.msra.mxu0 0.0
      %897 = vmatprep.subr.mxu0 0.0
      %898 = vmatpush1.msra.mxu0 0.0
      %899 = vmatprep.subr.mxu0 0.0
      %900 = vmatpush1.msra.mxu0 %v867
      %901 = vmatprep.subr.mxu0 0.0
      %902 = vmatpush2.msra.mxu0 0.0
      %903 = vmatprep.subr.mxu0 0.0
      %904 = vmatpush2.msra.mxu0 0.0
      %905 = vmatprep.subr.mxu0 0.0
      %906 = vmatpush2.msra.mxu0 0.0
      %907 = vmatprep.subr.mxu0 0.0
      %908 = vmatpush2.msra.mxu0 0.0
      %909 = vmatprep.subr.mxu0 0.0
      %910 = vmatpush2.msra.mxu0 0.0
      %911 = vmatprep.subr.mxu0 0.0
      %912 = vmatpush2.msra.mxu0 0.0
      %913 = vmatprep.subr.mxu0 0.0
      %914 = vmatpush2.msra.mxu0 0.0
      %915 = vmatprep.subr.mxu0 0.0
      %916 = vmatpush2.msra.mxu0 0.0
      %917 = vmatprep.subr.mxu0 0.0
      %918 = vmatpush2.msra.mxu0 0.0
      %919 = vmatprep.subr.mxu0 0.0
      %920 = vmatpush2.msra.mxu0 0.0
      %921 = vmatprep.subr.mxu0 0.0
      %922 = vmatpush2.msra.mxu0 0.0
      %923 = vmatprep.subr.mxu0 0.0
      %924 = vmatpush2.msra.mxu0 0.0
      %925 = vmatprep.subr.mxu0 0.0
      %926 = vmatpush2.msra.mxu0 0.0
      %927 = vmatprep.subr.mxu0 0.0
      %928 = vmatpush2.msra.mxu0 0.0
      %929 = vmatprep.subr.mxu0 0.0
      %930 = vmatpush2.msra.mxu0 0.0
      %931 = vmatprep.subr.mxu0 0.0
      %932 = vmatpush2.msra.mxu0 0.0
      %933 = vmatprep.mubr.f32.mxu0 0.0
      %934 = vmatmul.mubr.f32.gmra.mxu0 %v843
      %v935 = vpop.f32.mrf.mxu0
      %v936 = vadd.f32 0.0, %v935
      %v937 = vpop.f32.mrf.mxu0
      %938 = vmatprep.mubr.f32.mxu0 0.0
      %939 = vmatmul.mubr.f32.gmra.mxu0 %v846
      %v940 = vpop.f32.mrf.mxu0
      %v941 = vadd.f32 0.0, %v940
      %v942 = vpop.f32.mrf.mxu0
      %943 = vmatprep.mubr.f32.mxu0 0.0
      %944 = vmatmul.mubr.f32.gmra.mxu0 %v849
      %v945 = vpop.f32.mrf.mxu0
      %v946 = vadd.f32 0.0, %v945
      %v947 = vpop.f32.mrf.mxu0
      %948 = vmatprep.mubr.f32.mxu0 0.0
      %949 = vmatmul.mubr.f32.gmra.mxu0 %v852
      %v950 = vpop.f32.mrf.mxu0
      %v951 = vadd.f32 0.0, %v950
      %v952 = vpop.f32.mrf.mxu0
      %953 = vmatprep.mubr.f32.mxu0 0.0
      %954 = vmatmul.mubr.f32.gmra.mxu0 %v855
      %v955 = vpop.f32.mrf.mxu0
      %v956 = vadd.f32 0.0, %v955
      %v957 = vpop.f32.mrf.mxu0
      %958 = vmatprep.mubr.f32.mxu0 0.0
      %959 = vmatmul.mubr.f32.gmra.mxu0 %v858
      %v960 = vpop.f32.mrf.mxu0
      %v961 = vadd.f32 0.0, %v960
      %v962 = vpop.f32.mrf.mxu0
      %963 = vmatprep.mubr.f32.mxu0 0.0
      %964 = vmatmul.mubr.f32.gmra.mxu0 %v861
      %v965 = vpop.f32.mrf.mxu0
      %v966 = vadd.f32 0.0, %v965
      %v967 = vpop.f32.mrf.mxu0
      %968 = vmatprep.mubr.f32.mxu0 0.0
      %969 = vmatmul.mubr.f32.gmra.mxu0 %v864
      %v970 = vpop.f32.mrf.mxu0
      %v971 = vadd.f32 0.0, %v970
      %v972 = vpop.f32.mrf.mxu0
      %973 = vdwg.mxu0
      %v974 = vadd.f32 %v823, %v936
      %v975 = vadd.f32 %v824, %v941
      %v976 = vadd.f32 %v825, %v946
      %v977 = vadd.f32 %v826, %v951
      %v978 = vadd.f32 %v827, %v956
      %v979 = vadd.f32 %v828, %v961
      %v980 = vadd.f32 %v829, %v966
      %v981 = vadd.f32 %v830, %v971
      %s982 = scalar_lea.vmem [#allocation2], 192
      %v983 = vld [vmem:[%s982] sm:$0xff]
      %v984 = vld [vmem:[%s982 + $0x8] sm:$0xff]
      %v985 = vld [vmem:[%s982 + $0x10] sm:$0xff]
      %v986 = vld [vmem:[%s982 + $0x18] sm:$0xff]
      %v987 = vld [vmem:[%s982 + $0x20] sm:$0xff]
      %v988 = vld [vmem:[%s982 + $0x28] sm:$0xff]
      %v989 = vld [vmem:[%s982 + $0x30] sm:$0xff]
      %v990 = vld [vmem:[%s982 + $0x38] sm:$0xff]
      %s991 = scalar_lea.vmem %s351, 12
      %v992 = vld [vmem:[%s991] sm:$0xf]
      %v994 = vsel %vm538, %v983, 0
      %v997 = vsel %vm538, %v984, 0
      %v1000 = vsel %vm538, %v985, 0
      %v1003 = vsel %vm538, %v986, 0
      %v1006 = vsel %vm538, %v987, 0
      %v1009 = vsel %vm538, %v988, 0
      %v1012 = vsel %vm538, %v989, 0
      %v1015 = vsel %vm538, %v990, 0
      %v1018 = vsel %vm563, %v992, 0
      %1020 = vmatprep.subr.mxu0 0.0
      %1021 = vmatpush1.msra.mxu0 0.0
      %1022 = vmatprep.subr.mxu0 0.0
      %1023 = vmatpush1.msra.mxu0 0.0
      %1024 = vmatprep.subr.mxu0 0.0
      %1025 = vmatpush1.msra.mxu0 0.0
      %1026 = vmatprep.subr.mxu0 0.0
      %1027 = vmatpush1.msra.mxu0 0.0
      %1028 = vmatprep.subr.mxu0 0.0
      %1029 = vmatpush1.msra.mxu0 0.0
      %1030 = vmatprep.subr.mxu0 0.0
      %1031 = vmatpush1.msra.mxu0 0.0
      %1032 = vmatprep.subr.mxu0 0.0
      %1033 = vmatpush1.msra.mxu0 0.0
      %1034 = vmatprep.subr.mxu0 0.0
      %1035 = vmatpush1.msra.mxu0 0.0
      %1036 = vmatprep.subr.mxu0 0.0
      %1037 = vmatpush1.msra.mxu0 0.0
      %1038 = vmatprep.subr.mxu0 0.0
      %1039 = vmatpush1.msra.mxu0 0.0
      %1040 = vmatprep.subr.mxu0 0.0
      %1041 = vmatpush1.msra.mxu0 0.0
      %1042 = vmatprep.subr.mxu0 0.0
      %1043 = vmatpush1.msra.mxu0 0.0
      %1044 = vmatprep.subr.mxu0 0.0
      %1045 = vmatpush1.msra.mxu0 0.0
      %1046 = vmatprep.subr.mxu0 0.0
      %1047 = vmatpush1.msra.mxu0 0.0
      %1048 = vmatprep.subr.mxu0 0.0
      %1049 = vmatpush1.msra.mxu0 0.0
      %1050 = vmatprep.subr.mxu0 0.0
      %1051 = vmatpush1.msra.mxu0 %v1018
      %1052 = vmatprep.subr.mxu0 0.0
      %1053 = vmatpush2.msra.mxu0 0.0
      %1054 = vmatprep.subr.mxu0 0.0
      %1055 = vmatpush2.msra.mxu0 0.0
      %1056 = vmatprep.subr.mxu0 0.0
      %1057 = vmatpush2.msra.mxu0 0.0
      %1058 = vmatprep.subr.mxu0 0.0
      %1059 = vmatpush2.msra.mxu0 0.0
      %1060 = vmatprep.subr.mxu0 0.0
      %1061 = vmatpush2.msra.mxu0 0.0
      %1062 = vmatprep.subr.mxu0 0.0
      %1063 = vmatpush2.msra.mxu0 0.0
      %1064 = vmatprep.subr.mxu0 0.0
      %1065 = vmatpush2.msra.mxu0 0.0
      %1066 = vmatprep.subr.mxu0 0.0
      %1067 = vmatpush2.msra.mxu0 0.0
      %1068 = vmatprep.subr.mxu0 0.0
      %1069 = vmatpush2.msra.mxu0 0.0
      %1070 = vmatprep.subr.mxu0 0.0
      %1071 = vmatpush2.msra.mxu0 0.0
      %1072 = vmatprep.subr.mxu0 0.0
      %1073 = vmatpush2.msra.mxu0 0.0
      %1074 = vmatprep.subr.mxu0 0.0
      %1075 = vmatpush2.msra.mxu0 0.0
      %1076 = vmatprep.subr.mxu0 0.0
      %1077 = vmatpush2.msra.mxu0 0.0
      %1078 = vmatprep.subr.mxu0 0.0
      %1079 = vmatpush2.msra.mxu0 0.0
      %1080 = vmatprep.subr.mxu0 0.0
      %1081 = vmatpush2.msra.mxu0 0.0
      %1082 = vmatprep.subr.mxu0 0.0
      %1083 = vmatpush2.msra.mxu0 0.0
      %1084 = vmatprep.mubr.f32.mxu0 0.0
      %1085 = vmatmul.mubr.f32.gmra.mxu0 %v994
      %v1086 = vpop.f32.mrf.mxu0
      %v1087 = vadd.f32 0.0, %v1086
      %v1088 = vpop.f32.mrf.mxu0
      %1089 = vmatprep.mubr.f32.mxu0 0.0
      %1090 = vmatmul.mubr.f32.gmra.mxu0 %v997
      %v1091 = vpop.f32.mrf.mxu0
      %v1092 = vadd.f32 0.0, %v1091
      %v1093 = vpop.f32.mrf.mxu0
      %1094 = vmatprep.mubr.f32.mxu0 0.0
      %1095 = vmatmul.mubr.f32.gmra.mxu0 %v1000
      %v1096 = vpop.f32.mrf.mxu0
      %v1097 = vadd.f32 0.0, %v1096
      %v1098 = vpop.f32.mrf.mxu0
      %1099 = vmatprep.mubr.f32.mxu0 0.0
      %1100 = vmatmul.mubr.f32.gmra.mxu0 %v1003
      %v1101 = vpop.f32.mrf.mxu0
      %v1102 = vadd.f32 0.0, %v1101
      %v1103 = vpop.f32.mrf.mxu0
      %1104 = vmatprep.mubr.f32.mxu0 0.0
      %1105 = vmatmul.mubr.f32.gmra.mxu0 %v1006
      %v1106 = vpop.f32.mrf.mxu0
      %v1107 = vadd.f32 0.0, %v1106
      %v1108 = vpop.f32.mrf.mxu0
      %1109 = vmatprep.mubr.f32.mxu0 0.0
      %1110 = vmatmul.mubr.f32.gmra.mxu0 %v1009
      %v1111 = vpop.f32.mrf.mxu0
      %v1112 = vadd.f32 0.0, %v1111
      %v1113 = vpop.f32.mrf.mxu0
      %1114 = vmatprep.mubr.f32.mxu0 0.0
      %1115 = vmatmul.mubr.f32.gmra.mxu0 %v1012
      %v1116 = vpop.f32.mrf.mxu0
      %v1117 = vadd.f32 0.0, %v1116
      %v1118 = vpop.f32.mrf.mxu0
      %1119 = vmatprep.mubr.f32.mxu0 0.0
      %1120 = vmatmul.mubr.f32.gmra.mxu0 %v1015
      %v1121 = vpop.f32.mrf.mxu0
      %v1122 = vadd.f32 0.0, %v1121
      %v1123 = vpop.f32.mrf.mxu0
      %1124 = vdwg.mxu0
      %v1125 = vadd.f32 %v974, %v1087
      %v1126 = vadd.f32 %v975, %v1092
      %v1127 = vadd.f32 %v976, %v1097
      %v1128 = vadd.f32 %v977, %v1102
      %v1129 = vadd.f32 %v978, %v1107
      %v1130 = vadd.f32 %v979, %v1112
      %v1131 = vadd.f32 %v980, %v1117
      %v1132 = vadd.f32 %v981, %v1122
      %s1133 = scalar_lea.vmem [#allocation2], 256
      %v1134 = vld [vmem:[%s1133] sm:$0xff]
      %v1135 = vld [vmem:[%s1133 + $0x8] sm:$0xff]
      %v1136 = vld [vmem:[%s1133 + $0x10] sm:$0xff]
      %v1137 = vld [vmem:[%s1133 + $0x18] sm:$0xff]
      %v1138 = vld [vmem:[%s1133 + $0x20] sm:$0xff]
      %v1139 = vld [vmem:[%s1133 + $0x28] sm:$0xff]
      %v1140 = vld [vmem:[%s1133 + $0x30] sm:$0xff]
      %v1141 = vld [vmem:[%s1133 + $0x38] sm:$0xff]
      %s1142 = scalar_lea.vmem %s351, 16
      %v1143 = vld [vmem:[%s1142] sm:$0xf]
      %v1145 = vsel %vm538, %v1134, 0
      %v1148 = vsel %vm538, %v1135, 0
      %v1151 = vsel %vm538, %v1136, 0
      %v1154 = vsel %vm538, %v1137, 0
      %v1157 = vsel %vm538, %v1138, 0
      %v1160 = vsel %vm538, %v1139, 0
      %v1163 = vsel %vm538, %v1140, 0
      %v1166 = vsel %vm538, %v1141, 0
      %v1169 = vsel %vm563, %v1143, 0
      %1171 = vmatprep.subr.mxu0 0.0
      %1172 = vmatpush1.msra.mxu0 0.0
      %1173 = vmatprep.subr.mxu0 0.0
      %1174 = vmatpush1.msra.mxu0 0.0
      %1175 = vmatprep.subr.mxu0 0.0
      %1176 = vmatpush1.msra.mxu0 0.0
      %1177 = vmatprep.subr.mxu0 0.0
      %1178 = vmatpush1.msra.mxu0 0.0
      %1179 = vmatprep.subr.mxu0 0.0
      %1180 = vmatpush1.msra.mxu0 0.0
      %1181 = vmatprep.subr.mxu0 0.0
      %1182 = vmatpush1.msra.mxu0 0.0
      %1183 = vmatprep.subr.mxu0 0.0
      %1184 = vmatpush1.msra.mxu0 0.0
      %1185 = vmatprep.subr.mxu0 0.0
      %1186 = vmatpush1.msra.mxu0 0.0
      %1187 = vmatprep.subr.mxu0 0.0
      %1188 = vmatpush1.msra.mxu0 0.0
      %1189 = vmatprep.subr.mxu0 0.0
      %1190 = vmatpush1.msra.mxu0 0.0
      %1191 = vmatprep.subr.mxu0 0.0
      %1192 = vmatpush1.msra.mxu0 0.0
      %1193 = vmatprep.subr.mxu0 0.0
      %1194 = vmatpush1.msra.mxu0 0.0
      %1195 = vmatprep.subr.mxu0 0.0
      %1196 = vmatpush1.msra.mxu0 0.0
      %1197 = vmatprep.subr.mxu0 0.0
      %1198 = vmatpush1.msra.mxu0 0.0
      %1199 = vmatprep.subr.mxu0 0.0
      %1200 = vmatpush1.msra.mxu0 0.0
      %1201 = vmatprep.subr.mxu0 0.0
      %1202 = vmatpush1.msra.mxu0 %v1169
      %1203 = vmatprep.subr.mxu0 0.0
      %1204 = vmatpush2.msra.mxu0 0.0
      %1205 = vmatprep.subr.mxu0 0.0
      %1206 = vmatpush2.msra.mxu0 0.0
      %1207 = vmatprep.subr.mxu0 0.0
      %1208 = vmatpush2.msra.mxu0 0.0
      %1209 = vmatprep.subr.mxu0 0.0
      %1210 = vmatpush2.msra.mxu0 0.0
      %1211 = vmatprep.subr.mxu0 0.0
      %1212 = vmatpush2.msra.mxu0 0.0
      %1213 = vmatprep.subr.mxu0 0.0
      %1214 = vmatpush2.msra.mxu0 0.0
      %1215 = vmatprep.subr.mxu0 0.0
      %1216 = vmatpush2.msra.mxu0 0.0
      %1217 = vmatprep.subr.mxu0 0.0
      %1218 = vmatpush2.msra.mxu0 0.0
      %1219 = vmatprep.subr.mxu0 0.0
      %1220 = vmatpush2.msra.mxu0 0.0
      %1221 = vmatprep.subr.mxu0 0.0
      %1222 = vmatpush2.msra.mxu0 0.0
      %1223 = vmatprep.subr.mxu0 0.0
      %1224 = vmatpush2.msra.mxu0 0.0
      %1225 = vmatprep.subr.mxu0 0.0
      %1226 = vmatpush2.msra.mxu0 0.0
      %1227 = vmatprep.subr.mxu0 0.0
      %1228 = vmatpush2.msra.mxu0 0.0
      %1229 = vmatprep.subr.mxu0 0.0
      %1230 = vmatpush2.msra.mxu0 0.0
      %1231 = vmatprep.subr.mxu0 0.0
      %1232 = vmatpush2.msra.mxu0 0.0
      %1233 = vmatprep.subr.mxu0 0.0
      %1234 = vmatpush2.msra.mxu0 0.0
      %1235 = vmatprep.mubr.f32.mxu0 0.0
      %1236 = vmatmul.mubr.f32.gmra.mxu0 %v1145
      %v1237 = vpop.f32.mrf.mxu0
      %v1238 = vadd.f32 0.0, %v1237
      %v1239 = vpop.f32.mrf.mxu0
      %1240 = vmatprep.mubr.f32.mxu0 0.0
      %1241 = vmatmul.mubr.f32.gmra.mxu0 %v1148
      %v1242 = vpop.f32.mrf.mxu0
      %v1243 = vadd.f32 0.0, %v1242
      %v1244 = vpop.f32.mrf.mxu0
      %1245 = vmatprep.mubr.f32.mxu0 0.0
      %1246 = vmatmul.mubr.f32.gmra.mxu0 %v1151
      %v1247 = vpop.f32.mrf.mxu0
      %v1248 = vadd.f32 0.0, %v1247
      %v1249 = vpop.f32.mrf.mxu0
      %1250 = vmatprep.mubr.f32.mxu0 0.0
      %1251 = vmatmul.mubr.f32.gmra.mxu0 %v1154
      %v1252 = vpop.f32.mrf.mxu0
      %v1253 = vadd.f32 0.0, %v1252
      %v1254 = vpop.f32.mrf.mxu0
      %1255 = vmatprep.mubr.f32.mxu0 0.0
      %1256 = vmatmul.mubr.f32.gmra.mxu0 %v1157
      %v1257 = vpop.f32.mrf.mxu0
      %v1258 = vadd.f32 0.0, %v1257
      %v1259 = vpop.f32.mrf.mxu0
      %1260 = vmatprep.mubr.f32.mxu0 0.0
      %1261 = vmatmul.mubr.f32.gmra.mxu0 %v1160
      %v1262 = vpop.f32.mrf.mxu0
      %v1263 = vadd.f32 0.0, %v1262
      %v1264 = vpop.f32.mrf.mxu0
      %1265 = vmatprep.mubr.f32.mxu0 0.0
      %1266 = vmatmul.mubr.f32.gmra.mxu0 %v1163
      %v1267 = vpop.f32.mrf.mxu0
      %v1268 = vadd.f32 0.0, %v1267
      %v1269 = vpop.f32.mrf.mxu0
      %1270 = vmatprep.mubr.f32.mxu0 0.0
      %1271 = vmatmul.mubr.f32.gmra.mxu0 %v1166
      %v1272 = vpop.f32.mrf.mxu0
      %v1273 = vadd.f32 0.0, %v1272
      %v1274 = vpop.f32.mrf.mxu0
      %1275 = vdwg.mxu0
      %v1276 = vadd.f32 %v1125, %v1238
      %v1277 = vadd.f32 %v1126, %v1243
      %v1278 = vadd.f32 %v1127, %v1248
      %v1279 = vadd.f32 %v1128, %v1253
      %v1280 = vadd.f32 %v1129, %v1258
      %v1281 = vadd.f32 %v1130, %v1263
      %v1282 = vadd.f32 %v1131, %v1268
      %v1283 = vadd.f32 %v1132, %v1273
      %s1284 = scalar_lea.vmem [#allocation2], 320
      %v1285 = vld [vmem:[%s1284] sm:$0xff]
      %v1286 = vld [vmem:[%s1284 + $0x8] sm:$0xff]
      %v1287 = vld [vmem:[%s1284 + $0x10] sm:$0xff]
      %v1288 = vld [vmem:[%s1284 + $0x18] sm:$0xff]
      %v1289 = vld [vmem:[%s1284 + $0x20] sm:$0xff]
      %v1290 = vld [vmem:[%s1284 + $0x28] sm:$0xff]
      %v1291 = vld [vmem:[%s1284 + $0x30] sm:$0xff]
      %v1292 = vld [vmem:[%s1284 + $0x38] sm:$0xff]
      %s1293 = scalar_lea.vmem %s351, 20
      %v1294 = vld [vmem:[%s1293] sm:$0xf]
      %v1296 = vsel %vm538, %v1285, 0
      %v1299 = vsel %vm538, %v1286, 0
      %v1302 = vsel %vm538, %v1287, 0
      %v1305 = vsel %vm538, %v1288, 0
      %v1308 = vsel %vm538, %v1289, 0
      %v1311 = vsel %vm538, %v1290, 0
      %v1314 = vsel %vm538, %v1291, 0
      %v1317 = vsel %vm538, %v1292, 0
      %v1320 = vsel %vm563, %v1294, 0
      %1322 = vmatprep.subr.mxu0 0.0
      %1323 = vmatpush1.msra.mxu0 0.0
      %1324 = vmatprep.subr.mxu0 0.0
      %1325 = vmatpush1.msra.mxu0 0.0
      %1326 = vmatprep.subr.mxu0 0.0
      %1327 = vmatpush1.msra.mxu0 0.0
      %1328 = vmatprep.subr.mxu0 0.0
      %1329 = vmatpush1.msra.mxu0 0.0
      %1330 = vmatprep.subr.mxu0 0.0
      %1331 = vmatpush1.msra.mxu0 0.0
      %1332 = vmatprep.subr.mxu0 0.0
      %1333 = vmatpush1.msra.mxu0 0.0
      %1334 = vmatprep.subr.mxu0 0.0
      %1335 = vmatpush1.msra.mxu0 0.0
      %1336 = vmatprep.subr.mxu0 0.0
      %1337 = vmatpush1.msra.mxu0 0.0
      %1338 = vmatprep.subr.mxu0 0.0
      %1339 = vmatpush1.msra.mxu0 0.0
      %1340 = vmatprep.subr.mxu0 0.0
      %1341 = vmatpush1.msra.mxu0 0.0
      %1342 = vmatprep.subr.mxu0 0.0
      %1343 = vmatpush1.msra.mxu0 0.0
      %1344 = vmatprep.subr.mxu0 0.0
      %1345 = vmatpush1.msra.mxu0 0.0
      %1346 = vmatprep.subr.mxu0 0.0
      %1347 = vmatpush1.msra.mxu0 0.0
      %1348 = vmatprep.subr.mxu0 0.0
      %1349 = vmatpush1.msra.mxu0 0.0
      %1350 = vmatprep.subr.mxu0 0.0
      %1351 = vmatpush1.msra.mxu0 0.0
      %1352 = vmatprep.subr.mxu0 0.0
      %1353 = vmatpush1.msra.mxu0 %v1320
      %1354 = vmatprep.subr.mxu0 0.0
      %1355 = vmatpush2.msra.mxu0 0.0
      %1356 = vmatprep.subr.mxu0 0.0
      %1357 = vmatpush2.msra.mxu0 0.0
      %1358 = vmatprep.subr.mxu0 0.0
      %1359 = vmatpush2.msra.mxu0 0.0
      %1360 = vmatprep.subr.mxu0 0.0
      %1361 = vmatpush2.msra.mxu0 0.0
      %1362 = vmatprep.subr.mxu0 0.0
      %1363 = vmatpush2.msra.mxu0 0.0
      %1364 = vmatprep.subr.mxu0 0.0
      %1365 = vmatpush2.msra.mxu0 0.0
      %1366 = vmatprep.subr.mxu0 0.0
      %1367 = vmatpush2.msra.mxu0 0.0
      %1368 = vmatprep.subr.mxu0 0.0
      %1369 = vmatpush2.msra.mxu0 0.0
      %1370 = vmatprep.subr.mxu0 0.0
      %1371 = vmatpush2.msra.mxu0 0.0
      %1372 = vmatprep.subr.mxu0 0.0
      %1373 = vmatpush2.msra.mxu0 0.0
      %1374 = vmatprep.subr.mxu0 0.0
      %1375 = vmatpush2.msra.mxu0 0.0
      %1376 = vmatprep.subr.mxu0 0.0
      %1377 = vmatpush2.msra.mxu0 0.0
      %1378 = vmatprep.subr.mxu0 0.0
      %1379 = vmatpush2.msra.mxu0 0.0
      %1380 = vmatprep.subr.mxu0 0.0
      %1381 = vmatpush2.msra.mxu0 0.0
      %1382 = vmatprep.subr.mxu0 0.0
      %1383 = vmatpush2.msra.mxu0 0.0
      %1384 = vmatprep.subr.mxu0 0.0
      %1385 = vmatpush2.msra.mxu0 0.0
      %1386 = vmatprep.mubr.f32.mxu0 0.0
      %1387 = vmatmul.mubr.f32.gmra.mxu0 %v1296
      %v1388 = vpop.f32.mrf.mxu0
      %v1389 = vadd.f32 0.0, %v1388
      %v1390 = vpop.f32.mrf.mxu0
      %1391 = vmatprep.mubr.f32.mxu0 0.0
      %1392 = vmatmul.mubr.f32.gmra.mxu0 %v1299
      %v1393 = vpop.f32.mrf.mxu0
      %v1394 = vadd.f32 0.0, %v1393
      %v1395 = vpop.f32.mrf.mxu0
      %1396 = vmatprep.mubr.f32.mxu0 0.0
      %1397 = vmatmul.mubr.f32.gmra.mxu0 %v1302
      %v1398 = vpop.f32.mrf.mxu0
      %v1399 = vadd.f32 0.0, %v1398
      %v1400 = vpop.f32.mrf.mxu0
      %1401 = vmatprep.mubr.f32.mxu0 0.0
      %1402 = vmatmul.mubr.f32.gmra.mxu0 %v1305
      %v1403 = vpop.f32.mrf.mxu0
      %v1404 = vadd.f32 0.0, %v1403
      %v1405 = vpop.f32.mrf.mxu0
      %1406 = vmatprep.mubr.f32.mxu0 0.0
      %1407 = vmatmul.mubr.f32.gmra.mxu0 %v1308
      %v1408 = vpop.f32.mrf.mxu0
      %v1409 = vadd.f32 0.0, %v1408
      %v1410 = vpop.f32.mrf.mxu0
      %1411 = vmatprep.mubr.f32.mxu0 0.0
      %1412 = vmatmul.mubr.f32.gmra.mxu0 %v1311
      %v1413 = vpop.f32.mrf.mxu0
      %v1414 = vadd.f32 0.0, %v1413
      %v1415 = vpop.f32.mrf.mxu0
      %1416 = vmatprep.mubr.f32.mxu0 0.0
      %1417 = vmatmul.mubr.f32.gmra.mxu0 %v1314
      %v1418 = vpop.f32.mrf.mxu0
      %v1419 = vadd.f32 0.0, %v1418
      %v1420 = vpop.f32.mrf.mxu0
      %1421 = vmatprep.mubr.f32.mxu0 0.0
      %1422 = vmatmul.mubr.f32.gmra.mxu0 %v1317
      %v1423 = vpop.f32.mrf.mxu0
      %v1424 = vadd.f32 0.0, %v1423
      %v1425 = vpop.f32.mrf.mxu0
      %1426 = vdwg.mxu0
      %v1427 = vadd.f32 %v1276, %v1389
      %v1428 = vadd.f32 %v1277, %v1394
      %v1429 = vadd.f32 %v1278, %v1399
      %v1430 = vadd.f32 %v1279, %v1404
      %v1431 = vadd.f32 %v1280, %v1409
      %v1432 = vadd.f32 %v1281, %v1414
      %v1433 = vadd.f32 %v1282, %v1419
      %v1434 = vadd.f32 %v1283, %v1424
      %s1435 = scalar_lea.vmem [#allocation2], 384
      %v1436 = vld [vmem:[%s1435] sm:$0xff]
      %v1437 = vld [vmem:[%s1435 + $0x8] sm:$0xff]
      %v1438 = vld [vmem:[%s1435 + $0x10] sm:$0xff]
      %v1439 = vld [vmem:[%s1435 + $0x18] sm:$0xff]
      %v1440 = vld [vmem:[%s1435 + $0x20] sm:$0xff]
      %v1441 = vld [vmem:[%s1435 + $0x28] sm:$0xff]
      %v1442 = vld [vmem:[%s1435 + $0x30] sm:$0xff]
      %v1443 = vld [vmem:[%s1435 + $0x38] sm:$0xff]
      %s1444 = scalar_lea.vmem %s351, 24
      %v1445 = vld [vmem:[%s1444] sm:$0xf]
      %v1447 = vsel %vm538, %v1436, 0
      %v1450 = vsel %vm538, %v1437, 0
      %v1453 = vsel %vm538, %v1438, 0
      %v1456 = vsel %vm538, %v1439, 0
      %v1459 = vsel %vm538, %v1440, 0
      %v1462 = vsel %vm538, %v1441, 0
      %v1465 = vsel %vm538, %v1442, 0
      %v1468 = vsel %vm538, %v1443, 0
      %v1471 = vsel %vm563, %v1445, 0
      %1473 = vmatprep.subr.mxu0 0.0
      %1474 = vmatpush1.msra.mxu0 0.0
      %1475 = vmatprep.subr.mxu0 0.0
      %1476 = vmatpush1.msra.mxu0 0.0
      %1477 = vmatprep.subr.mxu0 0.0
      %1478 = vmatpush1.msra.mxu0 0.0
      %1479 = vmatprep.subr.mxu0 0.0
      %1480 = vmatpush1.msra.mxu0 0.0
      %1481 = vmatprep.subr.mxu0 0.0
      %1482 = vmatpush1.msra.mxu0 0.0
      %1483 = vmatprep.subr.mxu0 0.0
      %1484 = vmatpush1.msra.mxu0 0.0
      %1485 = vmatprep.subr.mxu0 0.0
      %1486 = vmatpush1.msra.mxu0 0.0
      %1487 = vmatprep.subr.mxu0 0.0
      %1488 = vmatpush1.msra.mxu0 0.0
      %1489 = vmatprep.subr.mxu0 0.0
      %1490 = vmatpush1.msra.mxu0 0.0
      %1491 = vmatprep.subr.mxu0 0.0
      %1492 = vmatpush1.msra.mxu0 0.0
      %1493 = vmatprep.subr.mxu0 0.0
      %1494 = vmatpush1.msra.mxu0 0.0
      %1495 = vmatprep.subr.mxu0 0.0
      %1496 = vmatpush1.msra.mxu0 0.0
      %1497 = vmatprep.subr.mxu0 0.0
      %1498 = vmatpush1.msra.mxu0 0.0
      %1499 = vmatprep.subr.mxu0 0.0
      %1500 = vmatpush1.msra.mxu0 0.0
      %1501 = vmatprep.subr.mxu0 0.0
      %1502 = vmatpush1.msra.mxu0 0.0
      %1503 = vmatprep.subr.mxu0 0.0
      %1504 = vmatpush1.msra.mxu0 %v1471
      %1505 = vmatprep.subr.mxu0 0.0
      %1506 = vmatpush2.msra.mxu0 0.0
      %1507 = vmatprep.subr.mxu0 0.0
      %1508 = vmatpush2.msra.mxu0 0.0
      %1509 = vmatprep.subr.mxu0 0.0
      %1510 = vmatpush2.msra.mxu0 0.0
      %1511 = vmatprep.subr.mxu0 0.0
      %1512 = vmatpush2.msra.mxu0 0.0
      %1513 = vmatprep.subr.mxu0 0.0
      %1514 = vmatpush2.msra.mxu0 0.0
      %1515 = vmatprep.subr.mxu0 0.0
      %1516 = vmatpush2.msra.mxu0 0.0
      %1517 = vmatprep.subr.mxu0 0.0
      %1518 = vmatpush2.msra.mxu0 0.0
      %1519 = vmatprep.subr.mxu0 0.0
      %1520 = vmatpush2.msra.mxu0 0.0
      %1521 = vmatprep.subr.mxu0 0.0
      %1522 = vmatpush2.msra.mxu0 0.0
      %1523 = vmatprep.subr.mxu0 0.0
      %1524 = vmatpush2.msra.mxu0 0.0
      %1525 = vmatprep.subr.mxu0 0.0
      %1526 = vmatpush2.msra.mxu0 0.0
      %1527 = vmatprep.subr.mxu0 0.0
      %1528 = vmatpush2.msra.mxu0 0.0
      %1529 = vmatprep.subr.mxu0 0.0
      %1530 = vmatpush2.msra.mxu0 0.0
      %1531 = vmatprep.subr.mxu0 0.0
      %1532 = vmatpush2.msra.mxu0 0.0
      %1533 = vmatprep.subr.mxu0 0.0
      %1534 = vmatpush2.msra.mxu0 0.0
      %1535 = vmatprep.subr.mxu0 0.0
      %1536 = vmatpush2.msra.mxu0 0.0
      %1537 = vmatprep.mubr.f32.mxu0 0.0
      %1538 = vmatmul.mubr.f32.gmra.mxu0 %v1447
      %v1539 = vpop.f32.mrf.mxu0
      %v1540 = vadd.f32 0.0, %v1539
      %v1541 = vpop.f32.mrf.mxu0
      %1542 = vmatprep.mubr.f32.mxu0 0.0
      %1543 = vmatmul.mubr.f32.gmra.mxu0 %v1450
      %v1544 = vpop.f32.mrf.mxu0
      %v1545 = vadd.f32 0.0, %v1544
      %v1546 = vpop.f32.mrf.mxu0
      %1547 = vmatprep.mubr.f32.mxu0 0.0
      %1548 = vmatmul.mubr.f32.gmra.mxu0 %v1453
      %v1549 = vpop.f32.mrf.mxu0
      %v1550 = vadd.f32 0.0, %v1549
      %v1551 = vpop.f32.mrf.mxu0
      %1552 = vmatprep.mubr.f32.mxu0 0.0
      %1553 = vmatmul.mubr.f32.gmra.mxu0 %v1456
      %v1554 = vpop.f32.mrf.mxu0
      %v1555 = vadd.f32 0.0, %v1554
      %v1556 = vpop.f32.mrf.mxu0
      %1557 = vmatprep.mubr.f32.mxu0 0.0
      %1558 = vmatmul.mubr.f32.gmra.mxu0 %v1459
      %v1559 = vpop.f32.mrf.mxu0
      %v1560 = vadd.f32 0.0, %v1559
      %v1561 = vpop.f32.mrf.mxu0
      %1562 = vmatprep.mubr.f32.mxu0 0.0
      %1563 = vmatmul.mubr.f32.gmra.mxu0 %v1462
      %v1564 = vpop.f32.mrf.mxu0
      %v1565 = vadd.f32 0.0, %v1564
      %v1566 = vpop.f32.mrf.mxu0
      %1567 = vmatprep.mubr.f32.mxu0 0.0
      %1568 = vmatmul.mubr.f32.gmra.mxu0 %v1465
      %v1569 = vpop.f32.mrf.mxu0
      %v1570 = vadd.f32 0.0, %v1569
      %v1571 = vpop.f32.mrf.mxu0
      %1572 = vmatprep.mubr.f32.mxu0 0.0
      %1573 = vmatmul.mubr.f32.gmra.mxu0 %v1468
      %v1574 = vpop.f32.mrf.mxu0
      %v1575 = vadd.f32 0.0, %v1574
      %v1576 = vpop.f32.mrf.mxu0
      %1577 = vdwg.mxu0
      %v1578 = vadd.f32 %v1427, %v1540
      %v1579 = vadd.f32 %v1428, %v1545
      %v1580 = vadd.f32 %v1429, %v1550
      %v1581 = vadd.f32 %v1430, %v1555
      %v1582 = vadd.f32 %v1431, %v1560
      %v1583 = vadd.f32 %v1432, %v1565
      %v1584 = vadd.f32 %v1433, %v1570
      %v1585 = vadd.f32 %v1434, %v1575
      %s1586 = scalar_lea.vmem [#allocation2], 448
      %v1587 = vld [vmem:[%s1586] sm:$0xff]
      %v1588 = vld [vmem:[%s1586 + $0x8] sm:$0xff]
      %v1589 = vld [vmem:[%s1586 + $0x10] sm:$0xff]
      %v1590 = vld [vmem:[%s1586 + $0x18] sm:$0xff]
      %v1591 = vld [vmem:[%s1586 + $0x20] sm:$0xff]
      %v1592 = vld [vmem:[%s1586 + $0x28] sm:$0xff]
      %v1593 = vld [vmem:[%s1586 + $0x30] sm:$0xff]
      %v1594 = vld [vmem:[%s1586 + $0x38] sm:$0xff]
      %s1595 = scalar_lea.vmem %s351, 28
      %v1596 = vld [vmem:[%s1595] sm:$0xf]
      %v1598 = vsel %vm538, %v1587, 0
      %v1601 = vsel %vm538, %v1588, 0
      %v1604 = vsel %vm538, %v1589, 0
      %v1607 = vsel %vm538, %v1590, 0
      %v1610 = vsel %vm538, %v1591, 0
      %v1613 = vsel %vm538, %v1592, 0
      %v1616 = vsel %vm538, %v1593, 0
      %v1619 = vsel %vm538, %v1594, 0
      %v1622 = vsel %vm563, %v1596, 0
      %1624 = vmatprep.subr.mxu0 0.0
      %1625 = vmatpush1.msra.mxu0 0.0
      %1626 = vmatprep.subr.mxu0 0.0
      %1627 = vmatpush1.msra.mxu0 0.0
      %1628 = vmatprep.subr.mxu0 0.0
      %1629 = vmatpush1.msra.mxu0 0.0
      %1630 = vmatprep.subr.mxu0 0.0
      %1631 = vmatpush1.msra.mxu0 0.0
      %1632 = vmatprep.subr.mxu0 0.0
      %1633 = vmatpush1.msra.mxu0 0.0
      %1634 = vmatprep.subr.mxu0 0.0
      %1635 = vmatpush1.msra.mxu0 0.0
      %1636 = vmatprep.subr.mxu0 0.0
      %1637 = vmatpush1.msra.mxu0 0.0
      %1638 = vmatprep.subr.mxu0 0.0
      %1639 = vmatpush1.msra.mxu0 0.0
      %1640 = vmatprep.subr.mxu0 0.0
      %1641 = vmatpush1.msra.mxu0 0.0
      %1642 = vmatprep.subr.mxu0 0.0
      %1643 = vmatpush1.msra.mxu0 0.0
      %1644 = vmatprep.subr.mxu0 0.0
      %1645 = vmatpush1.msra.mxu0 0.0
      %1646 = vmatprep.subr.mxu0 0.0
      %1647 = vmatpush1.msra.mxu0 0.0
      %1648 = vmatprep.subr.mxu0 0.0
      %1649 = vmatpush1.msra.mxu0 0.0
      %1650 = vmatprep.subr.mxu0 0.0
      %1651 = vmatpush1.msra.mxu0 0.0
      %1652 = vmatprep.subr.mxu0 0.0
      %1653 = vmatpush1.msra.mxu0 0.0
      %1654 = vmatprep.subr.mxu0 0.0
      %1655 = vmatpush1.msra.mxu0 %v1622
      %1656 = vmatprep.subr.mxu0 0.0
      %1657 = vmatpush2.msra.mxu0 0.0
      %1658 = vmatprep.subr.mxu0 0.0
      %1659 = vmatpush2.msra.mxu0 0.0
      %1660 = vmatprep.subr.mxu0 0.0
      %1661 = vmatpush2.msra.mxu0 0.0
      %1662 = vmatprep.subr.mxu0 0.0
      %1663 = vmatpush2.msra.mxu0 0.0
      %1664 = vmatprep.subr.mxu0 0.0
      %1665 = vmatpush2.msra.mxu0 0.0
      %1666 = vmatprep.subr.mxu0 0.0
      %1667 = vmatpush2.msra.mxu0 0.0
      %1668 = vmatprep.subr.mxu0 0.0
      %1669 = vmatpush2.msra.mxu0 0.0
      %1670 = vmatprep.subr.mxu0 0.0
      %1671 = vmatpush2.msra.mxu0 0.0
      %1672 = vmatprep.subr.mxu0 0.0
      %1673 = vmatpush2.msra.mxu0 0.0
      %1674 = vmatprep.subr.mxu0 0.0
      %1675 = vmatpush2.msra.mxu0 0.0
      %1676 = vmatprep.subr.mxu0 0.0
      %1677 = vmatpush2.msra.mxu0 0.0
      %1678 = vmatprep.subr.mxu0 0.0
      %1679 = vmatpush2.msra.mxu0 0.0
      %1680 = vmatprep.subr.mxu0 0.0
      %1681 = vmatpush2.msra.mxu0 0.0
      %1682 = vmatprep.subr.mxu0 0.0
      %1683 = vmatpush2.msra.mxu0 0.0
      %1684 = vmatprep.subr.mxu0 0.0
      %1685 = vmatpush2.msra.mxu0 0.0
      %1686 = vmatprep.subr.mxu0 0.0
      %1687 = vmatpush2.msra.mxu0 0.0
      %1688 = vmatprep.mubr.f32.mxu0 0.0
      %1689 = vmatmul.mubr.f32.gmra.mxu0 %v1598
      %v1690 = vpop.f32.mrf.mxu0
      %v1691 = vadd.f32 0.0, %v1690
      %v1692 = vpop.f32.mrf.mxu0
      %1693 = vmatprep.mubr.f32.mxu0 0.0
      %1694 = vmatmul.mubr.f32.gmra.mxu0 %v1601
      %v1695 = vpop.f32.mrf.mxu0
      %v1696 = vadd.f32 0.0, %v1695
      %v1697 = vpop.f32.mrf.mxu0
      %1698 = vmatprep.mubr.f32.mxu0 0.0
      %1699 = vmatmul.mubr.f32.gmra.mxu0 %v1604
      %v1700 = vpop.f32.mrf.mxu0
      %v1701 = vadd.f32 0.0, %v1700
      %v1702 = vpop.f32.mrf.mxu0
      %1703 = vmatprep.mubr.f32.mxu0 0.0
      %1704 = vmatmul.mubr.f32.gmra.mxu0 %v1607
      %v1705 = vpop.f32.mrf.mxu0
      %v1706 = vadd.f32 0.0, %v1705
      %v1707 = vpop.f32.mrf.mxu0
      %1708 = vmatprep.mubr.f32.mxu0 0.0
      %1709 = vmatmul.mubr.f32.gmra.mxu0 %v1610
      %v1710 = vpop.f32.mrf.mxu0
      %v1711 = vadd.f32 0.0, %v1710
      %v1712 = vpop.f32.mrf.mxu0
      %1713 = vmatprep.mubr.f32.mxu0 0.0
      %1714 = vmatmul.mubr.f32.gmra.mxu0 %v1613
      %v1715 = vpop.f32.mrf.mxu0
      %v1716 = vadd.f32 0.0, %v1715
      %v1717 = vpop.f32.mrf.mxu0
      %1718 = vmatprep.mubr.f32.mxu0 0.0
      %1719 = vmatmul.mubr.f32.gmra.mxu0 %v1616
      %v1720 = vpop.f32.mrf.mxu0
      %v1721 = vadd.f32 0.0, %v1720
      %v1722 = vpop.f32.mrf.mxu0
      %1723 = vmatprep.mubr.f32.mxu0 0.0
      %1724 = vmatmul.mubr.f32.gmra.mxu0 %v1619
      %v1725 = vpop.f32.mrf.mxu0
      %v1726 = vadd.f32 0.0, %v1725
      %v1727 = vpop.f32.mrf.mxu0
      %1728 = vdwg.mxu0
      %v1729 = vadd.f32 %v1578, %v1691
      %v1730 = vadd.f32 %v1579, %v1696
      %v1731 = vadd.f32 %v1580, %v1701
      %v1732 = vadd.f32 %v1581, %v1706
      %v1733 = vadd.f32 %v1582, %v1711
      %v1734 = vadd.f32 %v1583, %v1716
      %v1735 = vadd.f32 %v1584, %v1721
      %v1736 = vadd.f32 %v1585, %v1726
      %s1737 = scalar_lea.vmem [#allocation2], 512
      %v1738 = vld [vmem:[%s1737] sm:$0xff]
      %v1739 = vld [vmem:[%s1737 + $0x8] sm:$0xff]
      %v1740 = vld [vmem:[%s1737 + $0x10] sm:$0xff]
      %v1741 = vld [vmem:[%s1737 + $0x18] sm:$0xff]
      %v1742 = vld [vmem:[%s1737 + $0x20] sm:$0xff]
      %v1743 = vld [vmem:[%s1737 + $0x28] sm:$0xff]
      %v1744 = vld [vmem:[%s1737 + $0x30] sm:$0xff]
      %v1745 = vld [vmem:[%s1737 + $0x38] sm:$0xff]
      %s1746 = scalar_lea.vmem %s351, 32
      %v1747 = vld [vmem:[%s1746] sm:$0xf]
      %v1749 = vsel %vm538, %v1738, 0
      %v1752 = vsel %vm538, %v1739, 0
      %v1755 = vsel %vm538, %v1740, 0
      %v1758 = vsel %vm538, %v1741, 0
      %v1761 = vsel %vm538, %v1742, 0
      %v1764 = vsel %vm538, %v1743, 0
      %v1767 = vsel %vm538, %v1744, 0
      %v1770 = vsel %vm538, %v1745, 0
      %v1773 = vsel %vm563, %v1747, 0
      %1775 = vmatprep.subr.mxu0 0.0
      %1776 = vmatpush1.msra.mxu0 0.0
      %1777 = vmatprep.subr.mxu0 0.0
      %1778 = vmatpush1.msra.mxu0 0.0
      %1779 = vmatprep.subr.mxu0 0.0
      %1780 = vmatpush1.msra.mxu0 0.0
      %1781 = vmatprep.subr.mxu0 0.0
      %1782 = vmatpush1.msra.mxu0 0.0
      %1783 = vmatprep.subr.mxu0 0.0
      %1784 = vmatpush1.msra.mxu0 0.0
      %1785 = vmatprep.subr.mxu0 0.0
      %1786 = vmatpush1.msra.mxu0 0.0
      %1787 = vmatprep.subr.mxu0 0.0
      %1788 = vmatpush1.msra.mxu0 0.0
      %1789 = vmatprep.subr.mxu0 0.0
      %1790 = vmatpush1.msra.mxu0 0.0
      %1791 = vmatprep.subr.mxu0 0.0
      %1792 = vmatpush1.msra.mxu0 0.0
      %1793 = vmatprep.subr.mxu0 0.0
      %1794 = vmatpush1.msra.mxu0 0.0
      %1795 = vmatprep.subr.mxu0 0.0
      %1796 = vmatpush1.msra.mxu0 0.0
      %1797 = vmatprep.subr.mxu0 0.0
      %1798 = vmatpush1.msra.mxu0 0.0
      %1799 = vmatprep.subr.mxu0 0.0
      %1800 = vmatpush1.msra.mxu0 0.0
      %1801 = vmatprep.subr.mxu0 0.0
      %1802 = vmatpush1.msra.mxu0 0.0
      %1803 = vmatprep.subr.mxu0 0.0
      %1804 = vmatpush1.msra.mxu0 0.0
      %1805 = vmatprep.subr.mxu0 0.0
      %1806 = vmatpush1.msra.mxu0 %v1773
      %1807 = vmatprep.subr.mxu0 0.0
      %1808 = vmatpush2.msra.mxu0 0.0
      %1809 = vmatprep.subr.mxu0 0.0
      %1810 = vmatpush2.msra.mxu0 0.0
      %1811 = vmatprep.subr.mxu0 0.0
      %1812 = vmatpush2.msra.mxu0 0.0
      %1813 = vmatprep.subr.mxu0 0.0
      %1814 = vmatpush2.msra.mxu0 0.0
      %1815 = vmatprep.subr.mxu0 0.0
      %1816 = vmatpush2.msra.mxu0 0.0
      %1817 = vmatprep.subr.mxu0 0.0
      %1818 = vmatpush2.msra.mxu0 0.0
      %1819 = vmatprep.subr.mxu0 0.0
      %1820 = vmatpush2.msra.mxu0 0.0
      %1821 = vmatprep.subr.mxu0 0.0
      %1822 = vmatpush2.msra.mxu0 0.0
      %1823 = vmatprep.subr.mxu0 0.0
      %1824 = vmatpush2.msra.mxu0 0.0
      %1825 = vmatprep.subr.mxu0 0.0
      %1826 = vmatpush2.msra.mxu0 0.0
      %1827 = vmatprep.subr.mxu0 0.0
      %1828 = vmatpush2.msra.mxu0 0.0
      %1829 = vmatprep.subr.mxu0 0.0
      %1830 = vmatpush2.msra.mxu0 0.0
      %1831 = vmatprep.subr.mxu0 0.0
      %1832 = vmatpush2.msra.mxu0 0.0
      %1833 = vmatprep.subr.mxu0 0.0
      %1834 = vmatpush2.msra.mxu0 0.0
      %1835 = vmatprep.subr.mxu0 0.0
      %1836 = vmatpush2.msra.mxu0 0.0
      %1837 = vmatprep.subr.mxu0 0.0
      %1838 = vmatpush2.msra.mxu0 0.0
      %1839 = vmatprep.mubr.f32.mxu0 0.0
      %1840 = vmatmul.mubr.f32.gmra.mxu0 %v1749
      %v1841 = vpop.f32.mrf.mxu0
      %v1842 = vadd.f32 0.0, %v1841
      %v1843 = vpop.f32.mrf.mxu0
      %1844 = vmatprep.mubr.f32.mxu0 0.0
      %1845 = vmatmul.mubr.f32.gmra.mxu0 %v1752
      %v1846 = vpop.f32.mrf.mxu0
      %v1847 = vadd.f32 0.0, %v1846
      %v1848 = vpop.f32.mrf.mxu0
      %1849 = vmatprep.mubr.f32.mxu0 0.0
      %1850 = vmatmul.mubr.f32.gmra.mxu0 %v1755
      %v1851 = vpop.f32.mrf.mxu0
      %v1852 = vadd.f32 0.0, %v1851
      %v1853 = vpop.f32.mrf.mxu0
      %1854 = vmatprep.mubr.f32.mxu0 0.0
      %1855 = vmatmul.mubr.f32.gmra.mxu0 %v1758
      %v1856 = vpop.f32.mrf.mxu0
      %v1857 = vadd.f32 0.0, %v1856
      %v1858 = vpop.f32.mrf.mxu0
      %1859 = vmatprep.mubr.f32.mxu0 0.0
      %1860 = vmatmul.mubr.f32.gmra.mxu0 %v1761
      %v1861 = vpop.f32.mrf.mxu0
      %v1862 = vadd.f32 0.0, %v1861
      %v1863 = vpop.f32.mrf.mxu0
      %1864 = vmatprep.mubr.f32.mxu0 0.0
      %1865 = vmatmul.mubr.f32.gmra.mxu0 %v1764
      %v1866 = vpop.f32.mrf.mxu0
      %v1867 = vadd.f32 0.0, %v1866
      %v1868 = vpop.f32.mrf.mxu0
      %1869 = vmatprep.mubr.f32.mxu0 0.0
      %1870 = vmatmul.mubr.f32.gmra.mxu0 %v1767
      %v1871 = vpop.f32.mrf.mxu0
      %v1872 = vadd.f32 0.0, %v1871
      %v1873 = vpop.f32.mrf.mxu0
      %1874 = vmatprep.mubr.f32.mxu0 0.0
      %1875 = vmatmul.mubr.f32.gmra.mxu0 %v1770
      %v1876 = vpop.f32.mrf.mxu0
      %v1877 = vadd.f32 0.0, %v1876
      %v1878 = vpop.f32.mrf.mxu0
      %1879 = vdwg.mxu0
      %v1880 = vadd.f32 %v1729, %v1842
      %v1881 = vadd.f32 %v1730, %v1847
      %v1882 = vadd.f32 %v1731, %v1852
      %v1883 = vadd.f32 %v1732, %v1857
      %v1884 = vadd.f32 %v1733, %v1862
      %v1885 = vadd.f32 %v1734, %v1867
      %v1886 = vadd.f32 %v1735, %v1872
      %v1887 = vadd.f32 %v1736, %v1877
      %1888 = vst [vmem:[%s362] sm:$0xff] %v1880
      %1889 = vst [vmem:[%s362 + $0x8] sm:$0xff] %v1881
      %1890 = vst [vmem:[%s362 + $0x10] sm:$0xff] %v1882
      %1891 = vst [vmem:[%s362 + $0x18] sm:$0xff] %v1883
      %1892 = vst [vmem:[%s362 + $0x20] sm:$0xff] %v1884
      %1893 = vst [vmem:[%s362 + $0x28] sm:$0xff] %v1885
      %1894 = vst [vmem:[%s362 + $0x30] sm:$0xff] %v1886
      %1895 = vst [vmem:[%s362 + $0x38] sm:$0xff] %v1887
      %p1896 = scmp.lt.s32.totalorder %s21, 1
      %s1897 = scalar_select %p1896, %s21, 1
      %p1898 = scmp.lt.s32.totalorder %s22, 0
      %s1899 = scalar_select %p1898, %s22, 0
      %s1900 = smul.addr %s1897, 8
      %s1901 = sadd.s32 %s1899, %s1900
      %s1902 = smul.addr %s1901, 8
      %s1903 = scalar_lea.vmem %s6, %s1902
      // Predicated region
      $region49: #{downsample_conv2d.1} parent=43 // pred_check
        %p1904 = pneg %p205
      $region50: #{downsample_conv2d.1} parent=43 // pred_check_branch
        %1906 = sbr.rel (%p1904) target = $region52
      $region51: #{downsample_conv2d.1} parent=43 // pred_region
        _
      $region52: #{downsample_conv2d.1} parent=43 // pred_fallthru
        _
    $region44: #{downsample_conv2d.1} parent=5 // pred_fallthru
      _
    %p1907 = scmp.le.s32.totalorder 2, %s12
    // Predicated region
    $region53: #{downsample_conv2d.1} parent=5 // pred_check
      %p1908 = pneg %p1907
    $region54: #{downsample_conv2d.1} parent=5 // pred_check_branch
      %1910 = sbr.rel (%p1908) target = $region56
    $region55: #{downsample_conv2d.1} parent=5 // pred_region
      %s1911 = ssub.s32 %s12, 2
      // Predicated region
      $region57: #{downsample_conv2d.1} parent=55 // pred_check
        %p1912 = pneg %p211
      $region58: #{downsample_conv2d.1} parent=55 // pred_check_branch
        %1914 = sbr.rel (%p1912) target = $region60
      $region59: #{downsample_conv2d.1} parent=55 // pred_region
        %p1915 = scmp.lt.s32.totalorder %s23, 1
        %s1916 = scalar_select %p1915, %s23, 1
        %p1917 = scmp.lt.s32.totalorder %s24, 0
        %s1918 = scalar_select %p1917, %s24, 0
        %s1919 = smul.addr %s1916, 8
        %s1920 = sadd.s32 %s1918, %s1919
        %s1921 = smul.addr %s1920, 8
        %s1922 = scalar_lea.vmem %s6, %s1921
      $region60: #{downsample_conv2d.1} parent=55 // pred_fallthru
        _
    $region56: #{downsample_conv2d.1} parent=5 // pred_fallthru
      _
  $region6: #{downsample_conv2d.1} parent=0 // loop_footer
    %s16 = sadd.s32 1, %s12
  $region7: #{downsample_conv2d.1} parent=0 // loop_footer_branch
    %11 = sbr.rel target = $region3
  $region8: #{downsample_conv2d.1} parent=0 // loop_exit
    _

</llo_original>
